<compile_context>
chip_gen: v7x
topology: tpu7x:2x2x1
jax: 0.10.0
libtpu: 0.0.40
codegen_flags: <defaults>
</compile_context>

<pallas_src>
import functools

import jax
import jax.numpy as jnp
from jax.experimental import pallas as pl
from jax.experimental.pallas import tpu as pltpu

_BN_EPS = 1e-5


def _round_up(n, m):
    return ((n + m - 1) // m) * m


def _cdiv(a, b):
    return -(-a // b)


def _softplus(x):
    # numerically-stable log(1 + exp(x)), matches F.softplus
    return jnp.maximum(x, 0.0) + jnp.log1p(jnp.exp(-jnp.abs(x)))


@functools.lru_cache(maxsize=1)
def _vmem_budget_bytes():
    """Generation-aware VMEM budget: ~75% of this chip's per-core VMEM."""
    cap = 64 << 20  # conservative fallback (v7x-sized)
    try:
        info = pltpu.get_tpu_info()
        cap = int(getattr(info, "vmem_capacity_bytes", cap) or cap)
    except Exception:
        pass
    return (cap * 3) // 4


@functools.lru_cache(maxsize=1)
def _single_buffer_ok():
    """Feature-detect pl.Buffered(1) so constant-index operands (weights) are
    not pointlessly double-buffered; fall back to default buffering if the
    running JAX/Mosaic does not accept it."""
    try:
        def _k(x_ref, o_ref):
            o_ref[...] = x_ref[...] + 1.0

        out = pl.pallas_call(
            _k,
            grid=(2,),
            in_specs=[pl.BlockSpec((8, 128), lambda i: (0, 0),
                                   pipeline_mode=pl.Buffered(1))],
            out_specs=pl.BlockSpec((8, 128), lambda i: (i, 0)),
            out_shape=jax.ShapeDtypeStruct((16, 128), jnp.float32),
        )(jnp.zeros((8, 128), jnp.float32))
        jax.block_until_ready(out)
        return True
    except Exception:
        return False


def _plan_tiles(batch, d_in, hid_p, head_p, budget, cmult):
    """Pick batch tiles for both passes from the VMEM budget.

    cmult = 1 if constant-index operands are single-buffered, else 2.
    Pipelined (grid-varying) operands are always counted at 2x.
    """
    headroom = 4 << 20  # compiler-internal scratch / slack

    # ---- pass 1 -----------------------------------------------------------
    const1 = cmult * (d_in * hid_p * 2 + hid_p * 4          # w1 (bf16), b1
                      + hid_p * hid_p * 2 + hid_p * 4       # w2 (bf16), b2
                      + hid_p * head_p * 2)                  # fused head weight
    per_row1 = (2 * d_in * 4        # f32 x tile, double-buffered
                + d_in * 2          # bf16 cast of x inside the kernel
                + 2 * head_p * 2    # bf16 z tile, double-buffered
                + 2 * hid_p * 4     # f32 hidden activations (temporaries)
                + head_p * 4)       # f32 head accumulator before bf16 store
    avail1 = max(0, budget - const1 - headroom)
    tb = (avail1 // per_row1) // 8 * 8
    tb = max(8, min(1024, tb))
    if tb >= 128:
        tb = tb // 128 * 128
    # megacore: guarantee >= 2 batch tiles whenever the batch allows it
    tb = min(tb, max(8, _round_up(_cdiv(batch, 2), 8)))
    num_tiles = _cdiv(batch, tb)
    batch_p = num_tiles * tb

    # ---- pass 2 (pure HBM roofline; can afford a bigger tile) -------------
    const2 = cmult * 2 * head_p * 4                          # scale, shift
    per_row2 = (2 * head_p * 2      # bf16 z tile, double-buffered
                + 2 * head_p * 2    # bf16 out tile, double-buffered
                + 2 * head_p * 4)   # f32 temporaries
    avail2 = max(0, budget - const2 - headroom)
    max_rows2 = max(8, min(4096, (avail2 // per_row2) // 8 * 8))
    k_cap = max(1, max_rows2 // tb)
    if num_tiles >= 2:
        k_cap = min(k_cap, num_tiles // 2)   # keep >= 2 tiles for megacore
    k = 1
    for d in range(1, num_tiles + 1):
        if num_tiles % d == 0 and d <= k_cap:
            k = d
    tb2 = tb * k
    return tb, num_tiles, batch_p, tb2, batch_p // tb2


def encoder_forward(x, params):
    """Full Encoder forward: two pallas_calls over a batch-tiled grid."""
    f32, bf16 = jnp.float32, jnp.bfloat16
    batch, d_in = x.shape
    hidden = params["w1"].shape[1]
    T = params["wmu"].shape[1]

    hid_p = _round_up(hidden, 128)
    nsp_p = _round_up(T + 1, 128)      # no-softplus block: theta_loc | rd_loc
    sp_p = _round_up(T + 1, 128)       # softplus block: theta_scale | rd_scale
    head_p = nsp_p + sp_p

    budget = _vmem_budget_bytes()
    single_buf = _single_buffer_ok()
    cmult = 1 if single_buf else 2
    tb, num_tiles, batch_p, tb2, num_tiles2 = _plan_tiles(
        batch, d_in, hid_p, head_p, budget, cmult)

    def cspec(shape):
        # constant-index (VMEM-resident) operand; single-buffered if supported
        if single_buf:
            return pl.BlockSpec(shape, lambda *i: (0,) * len(shape),
                                pipeline_mode=pl.Buffered(1))
        return pl.BlockSpec(shape, lambda *i: (0,) * len(shape))

    # ---------------- pack weights (done once per model in production) -----
    def pad2(a, rows, cols):
        return jnp.pad(a, ((0, rows - a.shape[0]), (0, cols - a.shape[1])))

    w1 = pad2(params["w1"], d_in, hid_p).astype(bf16)     # (d_in, hid_p)
    b1 = pad2(params["b1"], 1, hid_p).astype(f32)
    w2 = pad2(params["w2"], hid_p, hid_p).astype(bf16)
    b2 = pad2(params["b2"], 1, hid_p).astype(f32)

    # fused head weight, laid out [theta_loc|rd_loc|pad || theta_scale|rd_scale|pad].
    # The pre-BN head biases (bmu/blv/brd) cancel exactly in BN -> dropped.
    wh = jnp.zeros((hid_p, head_p), f32)
    wh = wh.at[:hidden, 0:T].set(params["wmu"])
    wh = wh.at[:hidden, T].set(params["wrd"][:, 0])
    wh = wh.at[:hidden, nsp_p:nsp_p + T].set(params["wlv"])
    wh = wh.at[:hidden, nsp_p + T].set(params["wrd"][:, 1])
    wh = wh.astype(bf16)

    gamma = jnp.ones((1, head_p), f32)
    gamma = gamma.at[0, 0:T].set(params["gmu"][0])
    gamma = gamma.at[0, T].set(params["grd"][0, 0])
    gamma = gamma.at[0, nsp_p:nsp_p + T].set(params["glv"][0])
    gamma = gamma.at[0, nsp_p + T].set(params["grd"][0, 1])
    beta = jnp.zeros((1, head_p), f32)
    beta = beta.at[0, 0:T].set(params["betamu"][0])
    beta = beta.at[0, T].set(params["betard"][0, 0])
    beta = beta.at[0, nsp_p:nsp_p + T].set(params["betalv"][0])
    beta = beta.at[0, nsp_p + T].set(params["betard"][0, 1])

    # x: pad batch rows only (features stay unpadded & f32; the bf16 cast and
    # lane padding happen inside the kernel, saving a wrapper HBM pass on x).
    x_p = x if batch_p == batch else jnp.pad(x, ((0, batch_p - batch), (0, 0)))

    # ---------------- pass 1: MLP + fused heads + per-tile BN stats ---------
    def mlp_heads_kernel(x_ref, w1_ref, b1_ref, w2_ref, b2_ref, wh_ref,
                         z_ref, sum_ref, m2_ref):
        xb = x_ref[...].astype(bf16)
        h = jnp.dot(xb, w1_ref[...], preferred_element_type=f32) + b1_ref[...]
        h = jnp.maximum(h, 0.0)
        h = jnp.dot(h.astype(bf16), w2_ref[...],
                    preferred_element_type=f32) + b2_ref[...]
        h = jnp.maximum(h, 0.0)
        # TODO(synk): nn.Dropout is stochastic in training mode; identity here
        # (eval-mode semantics) keeps the kernel deterministic.
        z = jnp.dot(h.astype(bf16), wh_ref[...], preferred_element_type=f32)
        z_ref[...] = z.astype(z_ref.dtype)        # bf16 store: half the HBM bytes

        # per-tile BatchNorm stats, centered within the tile (numerically safe),
        # with batch-padding rows masked out; combined across tiles in wrapper.
        if batch_p != batch:
            row0 = pl.program_id(0) * tb
            rid = jax.lax.broadcasted_iota(jnp.int32, (tb, 1), 0) + row0
            valid = (rid < batch).astype(f32)
            n = jnp.maximum(jnp.sum(valid), 1.0)
            s = jnp.sum(z * valid, axis=0, keepdims=True)
            d = (z - s / n) * valid
        else:
            s = jnp.sum(z, axis=0, keepdims=True)
            d = z - s * (1.0 / tb)
        sum_ref[...] = s[None]
        m2_ref[...] = jnp.sum(d * d, axis=0, keepdims=True)[None]

    z_pre, tsum, tm2 = pl.pallas_call(
        mlp_heads_kernel,
        grid=(num_tiles,),
        in_specs=[
            pl.BlockSpec((tb, d_in), lambda i: (i, 0)),
            cspec((d_in, hid_p)),
            cspec((1, hid_p)),
            cspec((hid_p, hid_p)),
            cspec((1, hid_p)),
            cspec((hid_p, head_p)),
        ],
        out_specs=(
            pl.BlockSpec((tb, head_p), lambda i: (i, 0)),
            pl.BlockSpec((1, 1, head_p), lambda i: (i, 0, 0)),
            pl.BlockSpec((1, 1, head_p), lambda i: (i, 0, 0)),
        ),
        out_shape=(
            jax.ShapeDtypeStruct((batch_p, head_p), bf16),
            jax.ShapeDtypeStruct((num_tiles, 1, head_p), f32),
            jax.ShapeDtypeStruct((num_tiles, 1, head_p), f32),
        ),
        compiler_params=pltpu.CompilerParams(
            dimension_semantics=("parallel",), vmem_limit_bytes=budget),
    )(x_p, w1, b1, w2, b2, wh)

    # --------- combine per-tile stats (ANOVA / Chan) + fold BN affine -------
    n_t = jnp.clip(batch - jnp.arange(num_tiles) * tb, 1, tb).astype(f32)
    s_t = tsum[:, 0, :]
    m2_t = tm2[:, 0, :]
    mean = jnp.sum(s_t, axis=0, keepdims=True) / batch
    mean_t = s_t / n_t[:, None]
    m2 = (jnp.sum(m2_t, axis=0, keepdims=True)
          + jnp.sum(n_t[:, None] * (mean_t - mean) ** 2, axis=0, keepdims=True))
    var = m2 / batch                               # biased (PyTorch training BN)
    scale = gamma * jax.lax.rsqrt(var + _BN_EPS)
    shift = beta - mean * scale

    # ---------------- pass 2: BN affine + softplus on the tail block --------
    def bn_epilogue_kernel(z_ref, scale_ref, shift_ref, out_ref):
        z = z_ref[...].astype(f32) * scale_ref[...] + shift_ref[...]
        out_ref[...] = jnp.concatenate(
            [z[:, :nsp_p], _softplus(z[:, nsp_p:])], axis=-1).astype(out_ref.dtype)

    out = pl.pallas_call(
        bn_epilogue_kernel,
        grid=(num_tiles2,),
        in_specs=[
            pl.BlockSpec((tb2, head_p), lambda i: (i, 0)),
            cspec((1, head_p)),
            cspec((1, head_p)),
        ],
        out_specs=pl.BlockSpec((tb2, head_p), lambda i: (i, 0)),
        out_shape=jax.ShapeDtypeStruct((batch_p, head_p), bf16),
        input_output_aliases={0: 0},               # write in place over z_pre
        compiler_params=pltpu.CompilerParams(
            dimension_semantics=("parallel",), vmem_limit_bytes=budget),
    )(z_pre, scale, shift)

    theta_loc = out[:batch, 0:T].astype(f32)
    theta_scale = out[:batch, nsp_p:nsp_p + T].astype(f32)
    rd_loc = out[:batch, T].astype(f32)
    rd_scale = out[:batch, nsp_p + T].astype(f32)
    return theta_loc, theta_scale, rd_loc, rd_scale


def init_params(key, num_genes, num_topics, hidden):
    """Deterministic synthetic parameters (shapes from Encoder.__init__)."""
    d_in = num_genes + 1
    ks = jax.random.split(key, 10)

    def lin(kw, kb, fan_in, fan_out):
        # weights stored [in, out] (transpose of PyTorch's [out, in])
        w = jax.random.normal(kw, (fan_in, fan_out), jnp.float32) / jnp.sqrt(fan_in)
        b = jax.random.normal(kb, (1, fan_out), jnp.float32) * 0.01
        return w, b

    w1, b1 = lin(ks[0], ks[1], d_in, hidden)
    w2, b2 = lin(ks[2], ks[3], hidden, hidden)
    wmu, bmu = lin(ks[4], ks[5], hidden, num_topics)
    wlv, blv = lin(ks[6], ks[7], hidden, num_topics)
    wrd, brd = lin(ks[8], ks[9], hidden, 2)

    return {
        "w1": w1, "b1": b1, "w2": w2, "b2": b2,
        "wmu": wmu, "bmu": bmu, "wlv": wlv, "blv": blv, "wrd": wrd, "brd": brd,
        # BatchNorm affine params (PyTorch default init: gamma=1, beta=0)
        "gmu": jnp.ones((1, num_topics), jnp.float32),
        "betamu": jnp.zeros((1, num_topics), jnp.float32),
        "glv": jnp.ones((1, num_topics), jnp.float32),
        "betalv": jnp.zeros((1, num_topics), jnp.float32),
        "grd": jnp.ones((1, 2), jnp.float32),
        "betard": jnp.zeros((1, 2), jnp.float32),
    }


def reference_forward(x, params):
    """Pure-JAX PyTorch-semantics reference (bf16 matmuls, f32 BatchNorm).

    Includes the pre-BN head biases (they cancel in BN) and keeps the pre-BN
    activations in f32, so the kernel's bf16 intermediate storage shows up as
    a small (~0.4% relative) quantization difference.
    """
    bf16 = jnp.bfloat16

    def mm(a, w):
        return jnp.dot(a.astype(bf16), w.astype(bf16),
                       preferred_element_type=jnp.float32)

    h = jax.nn.relu(mm(x, params["w1"]) + params["b1"])
    h = jax.nn.relu(mm(h, params["w2"]) + params["b2"])
    # dropout: identity (eval semantics), matching the kernel

    def bn(z, g, b):
        m = jnp.mean(z, axis=0, keepdims=True)
        v = jnp.mean((z - m) ** 2, axis=0, keepdims=True)   # biased variance
        return g * (z - m) * jax.lax.rsqrt(v + _BN_EPS) + b

    mu = bn(mm(h, params["wmu"]) + params["bmu"], params["gmu"], params["betamu"])
    lv = jax.nn.softplus(bn(mm(h, params["wlv"]) + params["blv"],
                            params["glv"], params["betalv"]))
    rd = bn(mm(h, params["wrd"]) + params["brd"], params["grd"], params["betard"])
    return mu, lv, rd[:, 0], jax.nn.softplus(rd[:, 1])


if __name__ == "__main__":
    # small shapes consistent with the module: inputs are [batch, num_genes + 1].
    # batch=20 is deliberately NOT a multiple of the batch tile so the padded-row
    # masking and the cross-tile BatchNorm-stat combine are both exercised.
    batch = 20
    num_genes = 31   # -> fc1 input dim 32
    num_topics = 8
    hidden = 32

    # warm the feature probes (VMEM capacity query, pl.Buffered(1)) outside jit
    _ = _vmem_budget_bytes(), _single_buffer_ok()

    key = jax.random.PRNGKey(0)
    k_x, k_p = jax.random.split(key)
    x = jax.random.normal(k_x, (batch, num_genes + 1), jnp.float32)
    params = init_params(k_p, num_genes, num_topics, hidden)

    outs = jax.block_until_ready(jax.jit(encoder_forward)(x, params))
    refs = reference_forward(x, params)

    # tolerance budget: the bf16 store of the pre-BN head slab and of the BN
    # output quantizes at ~0.4% relative; everything else matches the
    # bf16-matmul / f32-accumulate reference numerics.
    for o, r in zip(outs, refs):
        assert o.shape == r.shape, (o.shape, r.shape)
        assert o.dtype == jnp.float32
        err = float(jnp.max(jnp.abs(o - r) / (1.0 + jnp.abs(r))))
        assert err < 5e-2, err

    print("KERNEL_OK")
</pallas_src>

<mosaic_0001>
module attributes {stable_mosaic.version = 11 : i64} {
  func.func @_k(%arg0: i32, %arg1: memref<8x128xf32, #tpu.memory_space<vmem>>, %arg2: memref<8x128xf32, #tpu.memory_space<vmem>>) attributes {dimension_semantics = [#tpu.dimension_semantics<arbitrary>], iteration_bounds = array<i64: 2>, scalar_prefetch = 0 : i64, scratch_operands = 0 : i64, tpu.core_type = #tpu.core_type<tc>, window_params = [{pipeline_mode = #tpu.pipeline_mode<synchronous>, transform_indices = @transform_0, window_bounds = array<i64: 8, 128>}, {transform_indices = @transform_1, window_bounds = array<i64: 8, 128>}]} {
    %c0 = arith.constant 0 : index
    %c0_0 = arith.constant 0 : index
    %0 = vector.load %arg1[%c0, %c0_0] : memref<8x128xf32, #tpu.memory_space<vmem>>, vector<8x128xf32>
    %cst = arith.constant 1.000000e+00 : f32
    %1 = vector.broadcast %cst : f32 to vector<8x128xf32>
    %2 = arith.addf %0, %1 : vector<8x128xf32>
    %c0_1 = arith.constant 0 : index
    %c0_2 = arith.constant 0 : index
    %3 = vector.load %arg2[%c0_1, %c0_2] : memref<8x128xf32, #tpu.memory_space<vmem>>, vector<8x128xf32>
    tpu.vector_store %arg2[%c0_1, %c0_2], %2 {strides = array<i32>} : memref<8x128xf32, #tpu.memory_space<vmem>>, vector<8x128xf32>,
    return
  }
  func.func @transform_0(%arg0: i32) -> (i32, i32) {
    %c0_i32 = arith.constant 0 : i32
    %c0_i32_0 = arith.constant 0 : i32
    %c0_i32_1 = arith.constant 0 : i32
    return %c0_i32, %c0_i32_0 : i32, i32
  }
  func.func @transform_1(%arg0: i32) -> (i32, i32) {
    %c0_i32 = arith.constant 0 : i32
    %c0_i32_0 = arith.constant 0 : i32
    return %arg0, %c0_i32 : i32, i32
  }
}

module attributes {stable_mosaic.version = 11 : i64} {
  func.func @mlp_heads_kernel(%arg0: i32, %arg1: memref<16x32xf32, #tpu.memory_space<vmem>>, %arg2: memref<32x128xbf16, #tpu.memory_space<vmem>>, %arg3: memref<1x128xf32, #tpu.memory_space<vmem>>, %arg4: memref<128x128xbf16, #tpu.memory_space<vmem>>, %arg5: memref<1x128xf32, #tpu.memory_space<vmem>>, %arg6: memref<128x256xbf16, #tpu.memory_space<vmem>>, %arg7: memref<16x256xbf16, #tpu.memory_space<vmem>>, %arg8: memref<1x1x256xf32, #tpu.memory_space<vmem>>, %arg9: memref<1x1x256xf32, #tpu.memory_space<vmem>>) attributes {dimension_semantics = [#tpu.dimension_semantics<parallel>], iteration_bounds = array<i64: 2>, scalar_prefetch = 0 : i64, scratch_operands = 0 : i64, tpu.core_type = #tpu.core_type<tc>, window_params = [{transform_indices = @transform_0, window_bounds = array<i64: 16, 32>}, {pipeline_mode = #tpu.pipeline_mode<synchronous>, transform_indices = @transform_1, window_bounds = array<i64: 32, 128>}, {pipeline_mode = #tpu.pipeline_mode<synchronous>, transform_indices = @transform_2, window_bounds = array<i64: 1, 128>}, {pipeline_mode = #tpu.pipeline_mode<synchronous>, transform_indices = @transform_3, window_bounds = array<i64: 128, 128>}, {pipeline_mode = #tpu.pipeline_mode<synchronous>, transform_indices = @transform_4, window_bounds = array<i64: 1, 128>}, {pipeline_mode = #tpu.pipeline_mode<synchronous>, transform_indices = @transform_5, window_bounds = array<i64: 128, 256>}, {transform_indices = @transform_6, window_bounds = array<i64: 16, 256>}, {transform_indices = @transform_7, window_bounds = array<i64: 1, 1, 256>}, {transform_indices = @transform_8, window_bounds = array<i64: 1, 1, 256>}]} {
    %c0 = arith.constant 0 : index
    %c0_0 = arith.constant 0 : index
    %0 = vector.load %arg1[%c0, %c0_0] : memref<16x32xf32, #tpu.memory_space<vmem>>, vector<16x32xf32>
    %1 = arith.truncf %0 : vector<16x32xf32> to vector<16x32xbf16>
    %c0_1 = arith.constant 0 : index
    %c0_2 = arith.constant 0 : index
    %2 = vector.load %arg2[%c0_1, %c0_2] : memref<32x128xbf16, #tpu.memory_space<vmem>>, vector<32x128xbf16>
    %cst = arith.constant dense<0.000000e+00> : vector<16x128xf32>
    %3 = tpu.matmul %1, %2, %cst {dimension_numbers = #tpu.dot_dimension_numbers<[1], [0], [0], [1], [0, 0, 1, 1], [], []>} : vector<16x32xbf16>, vector<32x128xbf16>, vector<16x128xf32> -> vector<16x128xf32>
    %c0_3 = arith.constant 0 : index
    %c0_4 = arith.constant 0 : index
    %4 = vector.load %arg3[%c0_3, %c0_4] : memref<1x128xf32, #tpu.memory_space<vmem>>, vector<1x128xf32>
    %5 = vector.broadcast %4 : vector<1x128xf32> to vector<16x128xf32>
    %6 = arith.addf %3, %5 : vector<16x128xf32>
    %cst_5 = arith.constant 0.000000e+00 : f32
    %7 = vector.broadcast %cst_5 : f32 to vector<16x128xf32>
    %8 = arith.maximumf %6, %7 : vector<16x128xf32>
    %9 = arith.truncf %8 : vector<16x128xf32> to vector<16x128xbf16>
    %c0_6 = arith.constant 0 : index
    %c0_7 = arith.constant 0 : index
    %10 = vector.load %arg4[%c0_6, %c0_7] : memref<128x128xbf16, #tpu.memory_space<vmem>>, vector<128x128xbf16>
    %cst_8 = arith.constant dense<0.000000e+00> : vector<16x128xf32>
    %11 = tpu.matmul %9, %10, %cst_8 {dimension_numbers = #tpu.dot_dimension_numbers<[1], [0], [0], [1], [0, 0, 1, 1], [], []>} : vector<16x128xbf16>, vector<128x128xbf16>, vector<16x128xf32> -> vector<16x128xf32>
    %c0_9 = arith.constant 0 : index
    %c0_10 = arith.constant 0 : index
    %12 = vector.load %arg5[%c0_9, %c0_10] : memref<1x128xf32, #tpu.memory_space<vmem>>, vector<1x128xf32>
    %13 = vector.broadcast %12 : vector<1x128xf32> to vector<16x128xf32>
    %14 = arith.addf %11, %13 : vector<16x128xf32>
    %cst_11 = arith.constant 0.000000e+00 : f32
    %15 = vector.broadcast %cst_11 : f32 to vector<16x128xf32>
    %16 = arith.maximumf %14, %15 : vector<16x128xf32>
    %17 = arith.truncf %16 : vector<16x128xf32> to vector<16x128xbf16>
    %c0_12 = arith.constant 0 : index
    %c0_13 = arith.constant 0 : index
    %18 = vector.load %arg6[%c0_12, %c0_13] : memref<128x256xbf16, #tpu.memory_space<vmem>>, vector<128x256xbf16>
    %cst_14 = arith.constant dense<0.000000e+00> : vector<16x256xf32>
    %19 = tpu.matmul %17, %18, %cst_14 {dimension_numbers = #tpu.dot_dimension_numbers<[1], [0], [0], [1], [0, 0, 1, 1], [], []>} : vector<16x128xbf16>, vector<128x256xbf16>, vector<16x256xf32> -> vector<16x256xf32>
    %20 = arith.truncf %19 : vector<16x256xf32> to vector<16x256xbf16>
    %c0_15 = arith.constant 0 : index
    %c0_16 = arith.constant 0 : index
    %21 = vector.load %arg7[%c0_15, %c0_16] : memref<16x256xbf16, #tpu.memory_space<vmem>>, vector<16x256xbf16>
    tpu.vector_store %arg7[%c0_15, %c0_16], %20 {strides = array<i32>} : memref<16x256xbf16, #tpu.memory_space<vmem>>, vector<16x256xbf16>,
    %c16_i32 = arith.constant 16 : i32
    %22 = arith.muli %arg0, %c16_i32 : i32
    %23 = tpu.iota {dimensions = array<i32: 0>} : vector<16x1xi32>
    %24 = vector.broadcast %22 : i32 to vector<16x1xi32>
    %25 = arith.addi %23, %24 : vector<16x1xi32>
    %c20_i32 = arith.constant 20 : i32
    %26 = vector.broadcast %c20_i32 : i32 to vector<16x1xi32>
    %27 = arith.cmpi slt, %25, %26 : vector<16x1xi32>
    %28 = arith.extui %27 : vector<16x1xi1> to vector<16x1xi32>
    %29 = arith.sitofp %28 : vector<16x1xi32> to vector<16x1xf32>
    %30 = vector.shape_cast %29 : vector<16x1xf32> to vector<1x16x1xf32>
    %cst_17 = arith.constant dense<0.000000e+00> : vector<1xf32>
    %31 = vector.multi_reduction <add>, %30, %cst_17 [1, 2] : vector<1x16x1xf32> to vector<1xf32>
    %32 = vector.shape_cast %31 : vector<1xf32> to vector<1x1x1xf32>
    %33 = vector.extract %32[0, 0, 0] : f32 from vector<1x1x1xf32>
    %cst_18 = arith.constant 1.000000e+00 : f32
    %34 = arith.maximumf %33, %cst_18 : f32
    %35 = vector.broadcast %29 : vector<16x1xf32> to vector<16x256xf32>
    %36 = arith.mulf %19, %35 : vector<16x256xf32>
    %cst_19 = arith.constant dense<0.000000e+00> : vector<256xf32>
    %37 = vector.multi_reduction <add>, %36, %cst_19 [0] : vector<16x256xf32> to vector<256xf32>
    %38 = vector.shape_cast %37 : vector<256xf32> to vector<1x256xf32>
    %39 = vector.broadcast %34 : f32 to vector<1x256xf32>
    %40 = arith.divf %38, %39 : vector<1x256xf32>
    %41 = vector.broadcast %40 : vector<1x256xf32> to vector<16x256xf32>
    %42 = arith.subf %19, %41 : vector<16x256xf32>
    %43 = vector.broadcast %29 : vector<16x1xf32> to vector<16x256xf32>
    %44 = arith.mulf %42, %43 : vector<16x256xf32>
    %45 = vector.shape_cast %38 : vector<1x256xf32> to vector<1x1x256xf32>
    %c0_20 = arith.constant 0 : index
    %c0_21 = arith.constant 0 : index
    %c0_22 = arith.constant 0 : index
    %46 = vector.load %arg8[%c0_20, %c0_21, %c0_22] : memref<1x1x256xf32, #tpu.memory_space<vmem>>, vector<1x1x256xf32>
    tpu.vector_store %arg8[%c0_20, %c0_21, %c0_22], %45 {strides = array<i32>} : memref<1x1x256xf32, #tpu.memory_space<vmem>>, vector<1x1x256xf32>,
    %47 = arith.mulf %44, %44 : vector<16x256xf32>
    %cst_23 = arith.constant dense<0.000000e+00> : vector<256xf32>
    %48 = vector.multi_reduction <add>, %47, %cst_23 [0] : vector<16x256xf32> to vector<256xf32>
    %49 = vector.shape_cast %48 : vector<256xf32> to vector<1x256xf32>
    %50 = vector.shape_cast %49 : vector<1x256xf32> to vector<1x1x256xf32>
    %c0_24 = arith.constant 0 : index
    %c0_25 = arith.constant 0 : index
    %c0_26 = arith.constant 0 : index
    %51 = vector.load %arg9[%c0_24, %c0_25, %c0_26] : memref<1x1x256xf32, #tpu.memory_space<vmem>>, vector<1x1x256xf32>
    tpu.vector_store %arg9[%c0_24, %c0_25, %c0_26], %50 {strides = array<i32>} : memref<1x1x256xf32, #tpu.memory_space<vmem>>, vector<1x1x256xf32>,
    return
  }
  func.func @transform_0(%arg0: i32) -> (i32, i32) {
    %c0_i32 = arith.constant 0 : i32
    %c0_i32_0 = arith.constant 0 : i32
    return %arg0, %c0_i32 : i32, i32
  }
  func.func @transform_1(%arg0: i32) -> (i32, i32) {
    %c0_i32 = arith.constant 0 : i32
    %c0_i32_0 = arith.constant 0 : i32
    %c0_i32_1 = arith.constant 0 : i32
    return %c0_i32, %c0_i32_0 : i32, i32
  }
  func.func @transform_2(%arg0: i32) -> (i32, i32) {
    %c0_i32 = arith.constant 0 : i32
    %c0_i32_0 = arith.constant 0 : i32
    %c0_i32_1 = arith.constant 0 : i32
    return %c0_i32, %c0_i32_0 : i32, i32
  }
  func.func @transform_3(%arg0: i32) -> (i32, i32) {
    %c0_i32 = arith.constant 0 : i32
    %c0_i32_0 = arith.constant 0 : i32
    %c0_i32_1 = arith.constant 0 : i32
    return %c0_i32, %c0_i32_0 : i32, i32
  }
  func.func @transform_4(%arg0: i32) -> (i32, i32) {
    %c0_i32 = arith.constant 0 : i32
    %c0_i32_0 = arith.constant 0 : i32
    %c0_i32_1 = arith.constant 0 : i32
    return %c0_i32, %c0_i32_0 : i32, i32
  }
  func.func @transform_5(%arg0: i32) -> (i32, i32) {
    %c0_i32 = arith.constant 0 : i32
    %c0_i32_0 = arith.constant 0 : i32
    %c0_i32_1 = arith.constant 0 : i32
    return %c0_i32, %c0_i32_0 : i32, i32
  }
  func.func @transform_6(%arg0: i32) -> (i32, i32) {
    %c0_i32 = arith.constant 0 : i32
    %c0_i32_0 = arith.constant 0 : i32
    return %arg0, %c0_i32 : i32, i32
  }
  func.func @transform_7(%arg0: i32) -> (i32, i32, i32) {
    %c0_i32 = arith.constant 0 : i32
    %c0_i32_0 = arith.constant 0 : i32
    %c0_i32_1 = arith.constant 0 : i32
    return %arg0, %c0_i32, %c0_i32_0 : i32, i32, i32
  }
  func.func @transform_8(%arg0: i32) -> (i32, i32, i32) {
    %c0_i32 = arith.constant 0 : i32
    %c0_i32_0 = arith.constant 0 : i32
    %c0_i32_1 = arith.constant 0 : i32
    return %arg0, %c0_i32, %c0_i32_0 : i32, i32, i32
  }
}

module attributes {stable_mosaic.version = 11 : i64} {
  func.func @bn_epilogue_kernel(%arg0: i32, %arg1: memref<16x256xbf16, #tpu.memory_space<vmem>>, %arg2: memref<1x256xf32, #tpu.memory_space<vmem>>, %arg3: memref<1x256xf32, #tpu.memory_space<vmem>>, %arg4: memref<16x256xbf16, #tpu.memory_space<vmem>>) attributes {dimension_semantics = [#tpu.dimension_semantics<parallel>], iteration_bounds = array<i64: 2>, scalar_prefetch = 0 : i64, scratch_operands = 0 : i64, tpu.core_type = #tpu.core_type<tc>, window_params = [{transform_indices = @transform_0, window_bounds = array<i64: 16, 256>}, {pipeline_mode = #tpu.pipeline_mode<synchronous>, transform_indices = @transform_1, window_bounds = array<i64: 1, 256>}, {pipeline_mode = #tpu.pipeline_mode<synchronous>, transform_indices = @transform_2, window_bounds = array<i64: 1, 256>}, {transform_indices = @transform_3, window_bounds = array<i64: 16, 256>}]} {
    %c0 = arith.constant 0 : index
    %c0_0 = arith.constant 0 : index
    %0 = vector.load %arg1[%c0, %c0_0] : memref<16x256xbf16, #tpu.memory_space<vmem>>, vector<16x256xbf16>
    %1 = arith.extf %0 : vector<16x256xbf16> to vector<16x256xf32>
    %c0_1 = arith.constant 0 : index
    %c0_2 = arith.constant 0 : index
    %2 = vector.load %arg2[%c0_1, %c0_2] : memref<1x256xf32, #tpu.memory_space<vmem>>, vector<1x256xf32>
    %3 = vector.broadcast %2 : vector<1x256xf32> to vector<16x256xf32>
    %4 = arith.mulf %1, %3 : vector<16x256xf32>
    %c0_3 = arith.constant 0 : index
    %c0_4 = arith.constant 0 : index
    %5 = vector.load %arg3[%c0_3, %c0_4] : memref<1x256xf32, #tpu.memory_space<vmem>>, vector<1x256xf32>
    %6 = vector.broadcast %5 : vector<1x256xf32> to vector<16x256xf32>
    %7 = arith.addf %4, %6 : vector<16x256xf32>
    %8 = vector.extract_strided_slice %7 {offsets = [0, 0], sizes = [16, 128], strides = [1, 1]} : vector<16x256xf32> to vector<16x128xf32>
    %9 = vector.extract_strided_slice %7 {offsets = [0, 128], sizes = [16, 128], strides = [1, 1]} : vector<16x256xf32> to vector<16x128xf32>
    %cst = arith.constant 0.000000e+00 : f32
    %10 = vector.broadcast %cst : f32 to vector<16x128xf32>
    %11 = arith.maximumf %9, %10 : vector<16x128xf32>
    %12 = math.absf %9 : vector<16x128xf32>
    %cst_5 = arith.constant 0.000000e+00 : f32
    %13 = vector.broadcast %cst_5 : f32 to vector<16x128xf32>
    %14 = arith.subf %13, %12 : vector<16x128xf32>
    %15 = math.exp %14 : vector<16x128xf32>
    %16 = math.log1p %15 : vector<16x128xf32>
    %17 = arith.addf %11, %16 : vector<16x128xf32>
    %18 = tpu.concatenate %8, %17 in 1 : vector<16x128xf32>, vector<16x128xf32> -> vector<16x256xf32>
    %19 = arith.truncf %18 : vector<16x256xf32> to vector<16x256xbf16>
    %c0_6 = arith.constant 0 : index
    %c0_7 = arith.constant 0 : index
    %20 = vector.load %arg4[%c0_6, %c0_7] : memref<16x256xbf16, #tpu.memory_space<vmem>>, vector<16x256xbf16>
    tpu.vector_store %arg4[%c0_6, %c0_7], %19 {strides = array<i32>} : memref<16x256xbf16, #tpu.memory_space<vmem>>, vector<16x256xbf16>,
    return
  }
  func.func @transform_0(%arg0: i32) -> (i32, i32) {
    %c0_i32 = arith.constant 0 : i32
    %c0_i32_0 = arith.constant 0 : i32
    return %arg0, %c0_i32 : i32, i32
  }
  func.func @transform_1(%arg0: i32) -> (i32, i32) {
    %c0_i32 = arith.constant 0 : i32
    %c0_i32_0 = arith.constant 0 : i32
    %c0_i32_1 = arith.constant 0 : i32
    return %c0_i32, %c0_i32_0 : i32, i32
  }
  func.func @transform_2(%arg0: i32) -> (i32, i32) {
    %c0_i32 = arith.constant 0 : i32
    %c0_i32_0 = arith.constant 0 : i32
    %c0_i32_1 = arith.constant 0 : i32
    return %c0_i32, %c0_i32_0 : i32, i32
  }
  func.func @transform_3(%arg0: i32) -> (i32, i32) {
    %c0_i32 = arith.constant 0 : i32
    %c0_i32_0 = arith.constant 0 : i32
    return %arg0, %c0_i32 : i32, i32
  }
}

</mosaic_0001>

<llo_original>
// kernel: tpu_custom_call.1
$region0: #{tpu_custom_call.1}
  #allocation0 [shape = 'u32[]', space=smem, size = 0x4, offset = 0x4, fixed_abs, tag = 'smem constant byte address 0x4 - core index']
  #allocation1 [shape = 'u32[144,128]{1,0:T(1,128)}', space=vmem, size = 0x12000, scoped, tag = 'internal scratch']
  %s0 = inlined_call_operand.hbm [shape: f32[8,128], index: 0, kind: input, shape index: {}]
  %s1 = inlined_call_operand.hbm [shape: f32[16,128], index: 1, kind: output, shape index: {}]
  %s2 = sld [smem:[#allocation0]]
  $region41: #{tpu_custom_call.1} parent=0
    _
  %s4 = ssub.s32 1, %s2
  %s5 = scalar_select 0, %s4, %s2
  $region1: #{tpu_custom_call.1} parent=0
    #allocation2 [shape = 'u8[4096]{0}', space=vmem, size = 0x1000, scoped, tag = 'input window, operand 0, single buffered']
    #allocation3 [shape = 's32[2]{0}', space=sflag, size = 0x8, scoped, tag = 'scoped memory for tpu_custom_call.1']
    #allocation4 [shape = 's32[2]{0}', space=sflag, size = 0x8, scoped, tag = 'scoped memory for tpu_custom_call.1']
    #allocation5 [shape = 'u8[8192]{0}', space=vmem, size = 0x2000, scoped, tag = 'output window, operand 0']
    %6 = vsyncpa [#allocation3], 0
    %7 = vsyncpa [#allocation4], 0
    %s8 = scalar_lea.sflag [#allocation4], 1
    %9 = vsyncpa %s8, 0
    loop: start=0, step=1, limit=4
    $region2: #{tpu_custom_call.1} parent=1 // loop_pre_header
      _
    $region3: #{tpu_custom_call.1} parent=1 // loop_header
      %s11 = sphi 0, %s15
      %p12 = scmp.ge.s32.totalorder %s11, 4
      %s19 = sphi 0, %s19
      %s21 = sphi 0, %s19
      %s22 = sphi 0, %s21
      %s36 = sphi 0, %s22
      %s42 = sphi 0, %s44
      %s45 = sphi 0, %s42
      %s46 = sphi 0, %s45
      %s62 = sphi 0, %s46
    $region4: #{tpu_custom_call.1} parent=1 // loop_header_branch
      %14 = sbr.rel (%p12) target = $region8
    $region5: #{tpu_custom_call.1} parent=1 // loop_body
      %s16 = ssub.s32 %s11, 1
      %s17 = ssub.s32 %s11, 2
      %s18 = sadd.s32 %s11, 1
      %s20 = sadd.s32 %s19, 1
      %p23 = scmp.eq.s32.totalorder %s11, 1
      %p24 = scmp.ne.s32.totalorder %s19, %s21
      %p25 = scmp.eq.s32.totalorder %s11, 0
      %p26 = por %p24, %p25
      %p27 = scmp.ne.s32.totalorder %s19, %s21
      %p28 = scmp.eq.s32.totalorder %s16, 1
      %p29 = por %p27, %p28
      %p30 = scmp.ne.s32.totalorder %s21, %s22
      %p31 = scmp.eq.s32.totalorder %s16, 0
      %p32 = por %p30, %p31
      %p33 = scmp.ne.s32.totalorder %s21, %s22
      %p34 = scmp.eq.s32.totalorder %s17, 1
      %p35 = por %p33, %p34
      %p37 = scmp.ne.s32.totalorder %s22, %s36
      %p38 = scmp.eq.s32.totalorder %s17, 0
      %p39 = por %p37, %p38
      %s40 = ssub.s32 %s11, %s18
      %p41 = scmp.eq.s32.totalorder %s40, 0
      %s43 = sadd.s32 %s42, 1
      %s44 = scalar_select %p41, %s42, %s43
      %p47 = pneg %p41
      %p48 = scmp.eq.s32.totalorder %s11, 1
      %p49 = por %p47, %p48
      %p50 = scmp.ne.s32.totalorder %s42, %s45
      %p51 = scmp.eq.s32.totalorder %s11, 0
      %p52 = por %p50, %p51
      %p53 = scmp.ne.s32.totalorder %s42, %s45
      %p54 = scmp.eq.s32.totalorder %s16, 1
      %p55 = por %p53, %p54
      %p56 = scmp.ne.s32.totalorder %s45, %s46
      %p57 = scmp.eq.s32.totalorder %s16, 0
      %p58 = por %p56, %p57
      %p59 = scmp.ne.s32.totalorder %s45, %s46
      %p60 = scmp.eq.s32.totalorder %s17, 1
      %p61 = por %p59, %p60
      %p63 = scmp.ne.s32.totalorder %s46, %s62
      %p64 = scmp.eq.s32.totalorder %s17, 0
      %p65 = por %p63, %p64
      %p66 = scmp.le.s32.totalorder 1, %s11
      %p67 = scmp.lt.s32.totalorder %s11, 3
      %p68 = pnand %p66, %p67
      %p69 = pneg %p68
      // Predicated region
      $region9: #{tpu_custom_call.1} parent=5 // pred_check
        _
      $region10: #{tpu_custom_call.1} parent=5 // pred_check_branch
        %71 = sbr.rel (%p68) target = $region12
      $region11: #{tpu_custom_call.1} parent=5 // pred_region
        %s72 = ssub.s32 %s11, 1
        // Predicated region
        $region13: #{tpu_custom_call.1} parent=11 // pred_check
          %p73 = pneg %p32
        $region14: #{tpu_custom_call.1} parent=11 // pred_check_branch
          %75 = sbr.rel (%p73) target = $region16
        $region15: #{tpu_custom_call.1} parent=11 // pred_region
          %s77 = ssub.s32 128, 128
          %78 = vsyncadd [#allocation3], %s77
          %s80 = sshll.u32 [#allocation2], 4
          %s81 = int_to_ptr.vmem [resolvable:$true] %s80
          %83 = dma.hbm_to_vmem [thread:$0]  %s0, 128, %s81, [#allocation3]
        $region16: #{tpu_custom_call.1} parent=11 // pred_fallthru
          _
      $region12: #{tpu_custom_call.1} parent=5 // pred_fallthru
        _
      %p84 = scmp.lt.s32.totalorder %s11, 2
      // Predicated region
      $region17: #{tpu_custom_call.1} parent=5 // pred_check
        %p85 = pneg %p84
      $region18: #{tpu_custom_call.1} parent=5 // pred_check_branch
        %87 = sbr.rel (%p85) target = $region20
      $region19: #{tpu_custom_call.1} parent=5 // pred_region
        _
      $region20: #{tpu_custom_call.1} parent=5 // pred_fallthru
        _
      %p88 = scmp.le.s32.totalorder 1, %s11
      %p89 = scmp.lt.s32.totalorder %s11, 3
      %p90 = pnand %p88, %p89
      %p91 = pneg %p90
      // Predicated region
      $region21: #{tpu_custom_call.1} parent=5 // pred_check
        _
      $region22: #{tpu_custom_call.1} parent=5 // pred_check_branch
        %93 = sbr.rel (%p90) target = $region24
      $region23: #{tpu_custom_call.1} parent=5 // pred_region
        %s94 = ssub.s32 %s11, 1
        // Predicated region
        $region25: #{tpu_custom_call.1} parent=23 // pred_check
          %p95 = pneg %p32
        $region26: #{tpu_custom_call.1} parent=23 // pred_check_branch
          %97 = sbr.rel (%p95) target = $region28
        $region27: #{tpu_custom_call.1} parent=23 // pred_region
          %98 = dma.done [#allocation3], 128
        $region28: #{tpu_custom_call.1} parent=23 // pred_fallthru
          _
        %p99 = pneg %p32
        %p100 = pneg %p29
        %p101 = pneg %p58
        %p102 = pneg %p55
        %s103 = sand.u32 %s45, 1
        %s104 = scalar_lea.sflag [#allocation4], %s103
        %s105 = sand.u32 %s45, 1
        %s106 = smul.addr %s105, 8
        %s107 = scalar_lea.vmem [#allocation5], %s106
        %v108 = vld [vmem:[#allocation2] sm:$0xff]
        %v109 = vadd.f32 %v108, 1.0
        %110 = vst [vmem:[%s107] sm:$0xff] %v109
        %s111 = sand.u32 %s45, 1
        %s112 = scalar_lea.sflag [#allocation4], %s111
        %s113 = sand.u32 %s45, 1
        %s114 = smul.addr %s113, 8
        %s115 = scalar_lea.vmem [#allocation5], %s114
        // Predicated region
        $region29: #{tpu_custom_call.1} parent=23 // pred_check
          %p116 = pneg %p55
        $region30: #{tpu_custom_call.1} parent=23 // pred_check_branch
          %118 = sbr.rel (%p116) target = $region32
        $region31: #{tpu_custom_call.1} parent=23 // pred_region
          %s120 = ssub.s32 128, 128
          %121 = vsyncadd %s112, %s120
          %s122 = smul.addr %s16, 128
          %s123 = scalar_lea.hbm %s1, %s122
          %s125 = sshll.u32 %s115, 4
          %s126 = int_to_ptr.vmem [resolvable:$true] %s125
          %128 = dma.vmem_to_hbm [thread:$0]  %s126, 128, %s123, %s112
        $region32: #{tpu_custom_call.1} parent=23 // pred_fallthru
          _
      $region24: #{tpu_custom_call.1} parent=5 // pred_fallthru
        _
      %p129 = scmp.le.s32.totalorder 2, %s11
      // Predicated region
      $region33: #{tpu_custom_call.1} parent=5 // pred_check
        %p130 = pneg %p129
      $region34: #{tpu_custom_call.1} parent=5 // pred_check_branch
        %132 = sbr.rel (%p130) target = $region36
      $region35: #{tpu_custom_call.1} parent=5 // pred_region
        %s133 = ssub.s32 %s11, 2
        // Predicated region
        $region37: #{tpu_custom_call.1} parent=35 // pred_check
          %p134 = pneg %p61
        $region38: #{tpu_custom_call.1} parent=35 // pred_check_branch
          %136 = sbr.rel (%p134) target = $region40
        $region39: #{tpu_custom_call.1} parent=35 // pred_region
          %s137 = sand.u32 %s46, 1
          %s138 = scalar_lea.sflag [#allocation4], %s137
          %s139 = sand.u32 %s46, 1
          %s140 = smul.addr %s139, 8
          %s141 = scalar_lea.vmem [#allocation5], %s140
          %142 = dma.done %s138, 128
        $region40: #{tpu_custom_call.1} parent=35 // pred_fallthru
          _
      $region36: #{tpu_custom_call.1} parent=5 // pred_fallthru
        _
    $region6: #{tpu_custom_call.1} parent=1 // loop_footer
      %s15 = sadd.s32 1, %s11
    $region7: #{tpu_custom_call.1} parent=1 // loop_footer_branch
      %10 = sbr.rel target = $region3
    $region8: #{tpu_custom_call.1} parent=1 // loop_exit
      _
    %143 = vsyncpa [#allocation3], 1
    %s144 = scalar_lea.sflag [#allocation3], 1
    %145 = vsyncpa %s144, 1
    %146 = vsyncpa [#allocation4], 1
    %s147 = scalar_lea.sflag [#allocation4], 1
    %148 = vsyncpa %s147, 1

// kernel: encoder_forward.2
$region0: #{encoder_forward.2}
  #allocation0 [shape = 'u32[]', space=smem, size = 0x4, offset = 0x4, fixed_abs, tag = 'smem constant byte address 0x4 - core index']
  #allocation1 [shape = 'u32[144,128]{1,0:T(1,128)}', space=vmem, size = 0x12000, scoped, tag = 'internal scratch']
  %s0 = inlined_call_operand.vmem [shape: f32[32,32], index: 0, kind: input, shape index: {}]
  %s1 = inlined_call_operand.vmem [shape: bf16[32,128], index: 1, kind: input, shape index: {}]
  %s2 = inlined_call_operand.vmem [shape: f32[1,128], index: 2, kind: input, shape index: {}]
  %s3 = inlined_call_operand.vmem [shape: bf16[128,128], index: 3, kind: input, shape index: {}]
  %s4 = inlined_call_operand.vmem [shape: f32[1,128], index: 4, kind: input, shape index: {}]
  %s5 = inlined_call_operand.vmem [shape: bf16[128,256], index: 5, kind: input, shape index: {}]
  %s6 = inlined_call_operand.vmem [shape: bf16[32,256], index: 6, kind: output, shape index: {0}]
  %s7 = inlined_call_operand.vmem [shape: f32[2,1,256], index: 7, kind: output, shape index: {1}]
  %s8 = inlined_call_operand.vmem [shape: f32[2,1,256], index: 8, kind: output, shape index: {2}]
  %9 = xla_tuple %s6, %s7, %s8
  %s10 = sld [smem:[#allocation0]]
  $region73: #{encoder_forward.2} parent=0
    _
  %s12 = ssub.s32 1, %s10
  %s13 = scalar_select 0, %s12, %s10
  loop: start=0, step=1, limit=4
  $region2: #{encoder_forward.2} parent=0 // loop_pre_header
    _
  $region3: #{encoder_forward.2} parent=0 // loop_header
    %s15 = sphi 0, %s19
    %p16 = scmp.ge.s32.totalorder %s15, 4
    %s25 = sphi 0, %s27
    %s28 = sphi 0, %s25
    %s29 = sphi 0, %s28
    %s45 = sphi 0, %s29
    %s49 = sphi 0, %s49
    %s51 = sphi 0, %s49
    %s52 = sphi 0, %s51
    %s66 = sphi 0, %s52
    %s70 = sphi 0, %s70
    %s72 = sphi 0, %s70
    %s73 = sphi 0, %s72
    %s87 = sphi 0, %s73
    %s91 = sphi 0, %s91
    %s93 = sphi 0, %s91
    %s94 = sphi 0, %s93
    %s108 = sphi 0, %s94
    %s112 = sphi 0, %s112
    %s114 = sphi 0, %s112
    %s115 = sphi 0, %s114
    %s129 = sphi 0, %s115
    %s133 = sphi 0, %s133
    %s135 = sphi 0, %s133
    %s136 = sphi 0, %s135
    %s150 = sphi 0, %s136
    %s156 = sphi 0, %s158
    %s159 = sphi 0, %s156
    %s160 = sphi 0, %s159
    %s176 = sphi 0, %s160
    %s182 = sphi 0, %s184
    %s185 = sphi 0, %s182
    %s186 = sphi 0, %s185
    %s202 = sphi 0, %s186
    %s208 = sphi 0, %s210
    %s211 = sphi 0, %s208
    %s212 = sphi 0, %s211
    %s228 = sphi 0, %s212
  $region4: #{encoder_forward.2} parent=0 // loop_header_branch
    %18 = sbr.rel (%p16) target = $region8
  $region5: #{encoder_forward.2} parent=0 // loop_body
    %s20 = ssub.s32 %s15, 1
    %s21 = ssub.s32 %s15, 2
    %s22 = sadd.s32 %s15, 1
    %s23 = ssub.s32 %s15, %s22
    %p24 = scmp.eq.s32.totalorder %s23, 0
    %s26 = sadd.s32 %s25, 1
    %s27 = scalar_select %p24, %s25, %s26
    %p30 = pneg %p24
    %p31 = scmp.eq.s32.totalorder %s15, 1
    %p32 = por %p30, %p31
    %p33 = scmp.ne.s32.totalorder %s25, %s28
    %p34 = scmp.eq.s32.totalorder %s15, 0
    %p35 = por %p33, %p34
    %p36 = scmp.ne.s32.totalorder %s25, %s28
    %p37 = scmp.eq.s32.totalorder %s20, 1
    %p38 = por %p36, %p37
    %p39 = scmp.ne.s32.totalorder %s28, %s29
    %p40 = scmp.eq.s32.totalorder %s20, 0
    %p41 = por %p39, %p40
    %p42 = scmp.ne.s32.totalorder %s28, %s29
    %p43 = scmp.eq.s32.totalorder %s21, 1
    %p44 = por %p42, %p43
    %p46 = scmp.ne.s32.totalorder %s29, %s45
    %p47 = scmp.eq.s32.totalorder %s21, 0
    %p48 = por %p46, %p47
    %s50 = sadd.s32 %s49, 1
    %p53 = scmp.eq.s32.totalorder %s15, 1
    %p54 = scmp.ne.s32.totalorder %s49, %s51
    %p55 = scmp.eq.s32.totalorder %s15, 0
    %p56 = por %p54, %p55
    %p57 = scmp.ne.s32.totalorder %s49, %s51
    %p58 = scmp.eq.s32.totalorder %s20, 1
    %p59 = por %p57, %p58
    %p60 = scmp.ne.s32.totalorder %s51, %s52
    %p61 = scmp.eq.s32.totalorder %s20, 0
    %p62 = por %p60, %p61
    %p63 = scmp.ne.s32.totalorder %s51, %s52
    %p64 = scmp.eq.s32.totalorder %s21, 1
    %p65 = por %p63, %p64
    %p67 = scmp.ne.s32.totalorder %s52, %s66
    %p68 = scmp.eq.s32.totalorder %s21, 0
    %p69 = por %p67, %p68
    %s71 = sadd.s32 %s70, 1
    %p74 = scmp.eq.s32.totalorder %s15, 1
    %p75 = scmp.ne.s32.totalorder %s70, %s72
    %p76 = scmp.eq.s32.totalorder %s15, 0
    %p77 = por %p75, %p76
    %p78 = scmp.ne.s32.totalorder %s70, %s72
    %p79 = scmp.eq.s32.totalorder %s20, 1
    %p80 = por %p78, %p79
    %p81 = scmp.ne.s32.totalorder %s72, %s73
    %p82 = scmp.eq.s32.totalorder %s20, 0
    %p83 = por %p81, %p82
    %p84 = scmp.ne.s32.totalorder %s72, %s73
    %p85 = scmp.eq.s32.totalorder %s21, 1
    %p86 = por %p84, %p85
    %p88 = scmp.ne.s32.totalorder %s73, %s87
    %p89 = scmp.eq.s32.totalorder %s21, 0
    %p90 = por %p88, %p89
    %s92 = sadd.s32 %s91, 1
    %p95 = scmp.eq.s32.totalorder %s15, 1
    %p96 = scmp.ne.s32.totalorder %s91, %s93
    %p97 = scmp.eq.s32.totalorder %s15, 0
    %p98 = por %p96, %p97
    %p99 = scmp.ne.s32.totalorder %s91, %s93
    %p100 = scmp.eq.s32.totalorder %s20, 1
    %p101 = por %p99, %p100
    %p102 = scmp.ne.s32.totalorder %s93, %s94
    %p103 = scmp.eq.s32.totalorder %s20, 0
    %p104 = por %p102, %p103
    %p105 = scmp.ne.s32.totalorder %s93, %s94
    %p106 = scmp.eq.s32.totalorder %s21, 1
    %p107 = por %p105, %p106
    %p109 = scmp.ne.s32.totalorder %s94, %s108
    %p110 = scmp.eq.s32.totalorder %s21, 0
    %p111 = por %p109, %p110
    %s113 = sadd.s32 %s112, 1
    %p116 = scmp.eq.s32.totalorder %s15, 1
    %p117 = scmp.ne.s32.totalorder %s112, %s114
    %p118 = scmp.eq.s32.totalorder %s15, 0
    %p119 = por %p117, %p118
    %p120 = scmp.ne.s32.totalorder %s112, %s114
    %p121 = scmp.eq.s32.totalorder %s20, 1
    %p122 = por %p120, %p121
    %p123 = scmp.ne.s32.totalorder %s114, %s115
    %p124 = scmp.eq.s32.totalorder %s20, 0
    %p125 = por %p123, %p124
    %p126 = scmp.ne.s32.totalorder %s114, %s115
    %p127 = scmp.eq.s32.totalorder %s21, 1
    %p128 = por %p126, %p127
    %p130 = scmp.ne.s32.totalorder %s115, %s129
    %p131 = scmp.eq.s32.totalorder %s21, 0
    %p132 = por %p130, %p131
    %s134 = sadd.s32 %s133, 1
    %p137 = scmp.eq.s32.totalorder %s15, 1
    %p138 = scmp.ne.s32.totalorder %s133, %s135
    %p139 = scmp.eq.s32.totalorder %s15, 0
    %p140 = por %p138, %p139
    %p141 = scmp.ne.s32.totalorder %s133, %s135
    %p142 = scmp.eq.s32.totalorder %s20, 1
    %p143 = por %p141, %p142
    %p144 = scmp.ne.s32.totalorder %s135, %s136
    %p145 = scmp.eq.s32.totalorder %s20, 0
    %p146 = por %p144, %p145
    %p147 = scmp.ne.s32.totalorder %s135, %s136
    %p148 = scmp.eq.s32.totalorder %s21, 1
    %p149 = por %p147, %p148
    %p151 = scmp.ne.s32.totalorder %s136, %s150
    %p152 = scmp.eq.s32.totalorder %s21, 0
    %p153 = por %p151, %p152
    %s154 = ssub.s32 %s15, %s22
    %p155 = scmp.eq.s32.totalorder %s154, 0
    %s157 = sadd.s32 %s156, 1
    %s158 = scalar_select %p155, %s156, %s157
    %p161 = pneg %p155
    %p162 = scmp.eq.s32.totalorder %s15, 1
    %p163 = por %p161, %p162
    %p164 = scmp.ne.s32.totalorder %s156, %s159
    %p165 = scmp.eq.s32.totalorder %s15, 0
    %p166 = por %p164, %p165
    %p167 = scmp.ne.s32.totalorder %s156, %s159
    %p168 = scmp.eq.s32.totalorder %s20, 1
    %p169 = por %p167, %p168
    %p170 = scmp.ne.s32.totalorder %s159, %s160
    %p171 = scmp.eq.s32.totalorder %s20, 0
    %p172 = por %p170, %p171
    %p173 = scmp.ne.s32.totalorder %s159, %s160
    %p174 = scmp.eq.s32.totalorder %s21, 1
    %p175 = por %p173, %p174
    %p177 = scmp.ne.s32.totalorder %s160, %s176
    %p178 = scmp.eq.s32.totalorder %s21, 0
    %p179 = por %p177, %p178
    %s180 = ssub.s32 %s15, %s22
    %p181 = scmp.eq.s32.totalorder %s180, 0
    %s183 = sadd.s32 %s182, 1
    %s184 = scalar_select %p181, %s182, %s183
    %p187 = pneg %p181
    %p188 = scmp.eq.s32.totalorder %s15, 1
    %p189 = por %p187, %p188
    %p190 = scmp.ne.s32.totalorder %s182, %s185
    %p191 = scmp.eq.s32.totalorder %s15, 0
    %p192 = por %p190, %p191
    %p193 = scmp.ne.s32.totalorder %s182, %s185
    %p194 = scmp.eq.s32.totalorder %s20, 1
    %p195 = por %p193, %p194
    %p196 = scmp.ne.s32.totalorder %s185, %s186
    %p197 = scmp.eq.s32.totalorder %s20, 0
    %p198 = por %p196, %p197
    %p199 = scmp.ne.s32.totalorder %s185, %s186
    %p200 = scmp.eq.s32.totalorder %s21, 1
    %p201 = por %p199, %p200
    %p203 = scmp.ne.s32.totalorder %s186, %s202
    %p204 = scmp.eq.s32.totalorder %s21, 0
    %p205 = por %p203, %p204
    %s206 = ssub.s32 %s15, %s22
    %p207 = scmp.eq.s32.totalorder %s206, 0
    %s209 = sadd.s32 %s208, 1
    %s210 = scalar_select %p207, %s208, %s209
    %p213 = pneg %p207
    %p214 = scmp.eq.s32.totalorder %s15, 1
    %p215 = por %p213, %p214
    %p216 = scmp.ne.s32.totalorder %s208, %s211
    %p217 = scmp.eq.s32.totalorder %s15, 0
    %p218 = por %p216, %p217
    %p219 = scmp.ne.s32.totalorder %s208, %s211
    %p220 = scmp.eq.s32.totalorder %s20, 1
    %p221 = por %p219, %p220
    %p222 = scmp.ne.s32.totalorder %s211, %s212
    %p223 = scmp.eq.s32.totalorder %s20, 0
    %p224 = por %p222, %p223
    %p225 = scmp.ne.s32.totalorder %s211, %s212
    %p226 = scmp.eq.s32.totalorder %s21, 1
    %p227 = por %p225, %p226
    %p229 = scmp.ne.s32.totalorder %s212, %s228
    %p230 = scmp.eq.s32.totalorder %s21, 0
    %p231 = por %p229, %p230
    %p232 = scmp.le.s32.totalorder 1, %s15
    %p233 = scmp.lt.s32.totalorder %s15, 3
    %p234 = pnand %p232, %p233
    %p235 = pneg %p234
    // Predicated region
    $region9: #{encoder_forward.2} parent=5 // pred_check
      _
    $region10: #{encoder_forward.2} parent=5 // pred_check_branch
      %237 = sbr.rel (%p234) target = $region12
    $region11: #{encoder_forward.2} parent=5 // pred_region
      %s238 = ssub.s32 %s15, 1
      // Predicated region
      $region13: #{encoder_forward.2} parent=11 // pred_check
        %p239 = pneg %p62
      $region14: #{encoder_forward.2} parent=11 // pred_check_branch
        %241 = sbr.rel (%p239) target = $region16
      $region15: #{encoder_forward.2} parent=11 // pred_region
        _
      $region16: #{encoder_forward.2} parent=11 // pred_fallthru
        _
      // Predicated region
      $region17: #{encoder_forward.2} parent=11 // pred_check
        %p242 = pneg %p83
      $region18: #{encoder_forward.2} parent=11 // pred_check_branch
        %244 = sbr.rel (%p242) target = $region20
      $region19: #{encoder_forward.2} parent=11 // pred_region
        _
      $region20: #{encoder_forward.2} parent=11 // pred_fallthru
        _
      // Predicated region
      $region21: #{encoder_forward.2} parent=11 // pred_check
        %p245 = pneg %p104
      $region22: #{encoder_forward.2} parent=11 // pred_check_branch
        %247 = sbr.rel (%p245) target = $region24
      $region23: #{encoder_forward.2} parent=11 // pred_region
        _
      $region24: #{encoder_forward.2} parent=11 // pred_fallthru
        _
      // Predicated region
      $region25: #{encoder_forward.2} parent=11 // pred_check
        %p248 = pneg %p125
      $region26: #{encoder_forward.2} parent=11 // pred_check_branch
        %250 = sbr.rel (%p248) target = $region28
      $region27: #{encoder_forward.2} parent=11 // pred_region
        _
      $region28: #{encoder_forward.2} parent=11 // pred_fallthru
        _
      // Predicated region
      $region29: #{encoder_forward.2} parent=11 // pred_check
        %p251 = pneg %p146
      $region30: #{encoder_forward.2} parent=11 // pred_check_branch
        %253 = sbr.rel (%p251) target = $region32
      $region31: #{encoder_forward.2} parent=11 // pred_region
        _
      $region32: #{encoder_forward.2} parent=11 // pred_fallthru
        _
    $region12: #{encoder_forward.2} parent=5 // pred_fallthru
      _
    %p254 = scmp.lt.s32.totalorder %s15, 2
    // Predicated region
    $region33: #{encoder_forward.2} parent=5 // pred_check
      %p255 = pneg %p254
    $region34: #{encoder_forward.2} parent=5 // pred_check_branch
      %257 = sbr.rel (%p255) target = $region36
    $region35: #{encoder_forward.2} parent=5 // pred_region
      // Predicated region
      $region37: #{encoder_forward.2} parent=35 // pred_check
        %p258 = pneg %p35
      $region38: #{encoder_forward.2} parent=35 // pred_check_branch
        %260 = sbr.rel (%p258) target = $region40
      $region39: #{encoder_forward.2} parent=35 // pred_region
        %s261 = smul.u32 2, %s15
        %p262 = scmp.lt.s32.totalorder %s261, 3
        %s263 = scalar_select %p262, %s261, 3
        %s264 = smul.addr %s263, 8
        %s265 = scalar_lea.vmem %s0, %s264
        %s266 = smul.u32 2, %s15
      $region40: #{encoder_forward.2} parent=35 // pred_fallthru
        _
    $region36: #{encoder_forward.2} parent=5 // pred_fallthru
      _
    %p267 = scmp.le.s32.totalorder 1, %s15
    %p268 = scmp.lt.s32.totalorder %s15, 3
    %p269 = pnand %p267, %p268
    %p270 = pneg %p269
    // Predicated region
    $region41: #{encoder_forward.2} parent=5 // pred_check
      _
    $region42: #{encoder_forward.2} parent=5 // pred_check_branch
      %272 = sbr.rel (%p269) target = $region44
    $region43: #{encoder_forward.2} parent=5 // pred_region
      %s273 = ssub.s32 %s15, 1
      %s274 = smul.u32 2, %s20
      %p275 = scmp.lt.s32.totalorder %s274, 3
      %s276 = scalar_select %p275, %s274, 3
      %s277 = smul.addr %s276, 8
      %s278 = scalar_lea.vmem %s0, %s277
      %p279 = pneg %p41
      %p280 = pneg %p38
      %p281 = pneg %p62
      %p282 = pneg %p59
      %p283 = pneg %p83
      %p284 = pneg %p80
      %p285 = pneg %p104
      %p286 = pneg %p101
      %p287 = pneg %p125
      %p288 = pneg %p122
      %p289 = pneg %p146
      %p290 = pneg %p143
      %p291 = pneg %p172
      %p292 = pneg %p169
      %s293 = smul.u32 2, %s20
      %p294 = scmp.lt.s32.totalorder %s293, 3
      %s295 = scalar_select %p294, %s293, 3
      %s296 = smul.addr %s295, 2
      %s297 = smul.addr %s296, 4
      %s298 = scalar_lea.vmem %s6, %s297
      %p299 = pneg %p198
      %p300 = pneg %p195
      %p301 = scmp.lt.s32.totalorder %s20, 1
      %s302 = scalar_select %p301, %s20, 1
      %s303 = smul.addr %s302, 2
      %s304 = scalar_lea.vmem %s7, %s303
      %p305 = pneg %p224
      %p306 = pneg %p221
      %p307 = scmp.lt.s32.totalorder %s20, 1
      %s308 = scalar_select %p307, %s20, 1
      %s309 = smul.addr %s308, 2
      %s310 = scalar_lea.vmem %s8, %s309
      %s311 = smul.u32 2, %s20
      %p312 = scmp.lt.s32.totalorder %s311, 3
      %s313 = scalar_select %p312, %s311, 3
      %s314 = smul.addr %s313, 8
      %s315 = scalar_lea.vmem %s0, %s314
      %s316 = smul.u32 2, %s20
      %s317 = smul.u32 2, %s20
      %p318 = scmp.lt.s32.totalorder %s317, 3
      %s319 = scalar_select %p318, %s317, 3
      %s320 = smul.addr %s319, 2
      %s321 = smul.addr %s320, 4
      %s322 = scalar_lea.vmem %s6, %s321
      %s323 = smul.u32 2, %s20
      %p324 = scmp.lt.s32.totalorder %s20, 1
      %s325 = scalar_select %p324, %s20, 1
      %s326 = smul.addr %s325, 2
      %s327 = scalar_lea.vmem %s7, %s326
      %p328 = scmp.lt.s32.totalorder %s20, 1
      %s329 = scalar_select %p328, %s20, 1
      %s330 = smul.addr %s329, 2
      %s331 = scalar_lea.vmem %s8, %s330
      %v333 = vld [vmem:[%s315] sm:$0xff]
      %v334 = vld [vmem:[%s315 + $0x8] sm:$0xff]
      %v335 = vpack.c.bf16 %v334, %v333
      %v336 = vld [vmem:[%s1] sm:$0xf]
      %v337 = vld [vmem:[%s1 + $0x4] sm:$0xf]
      %v338 = vld [vmem:[%s1 + $0x8] sm:$0xf]
      %v339 = vld [vmem:[%s1 + $0xc] sm:$0xf]
      %v340 = vld [vmem:[%s2] sm:$0x1]
      %v342 = vlaneseq
      %v343 = vshrl.u32 %v342, 7
      %v344 = vsub.s32 0, %v343
      %v345 = vrot.slane %v340, %v344
      %v351 = vunpack.c.l.b16 %v336
      %v352 = vunpack.c.l.b16 %v337
      %v353 = vunpack.c.l.b16 %v338
      %v354 = vunpack.c.l.b16 %v339
      %v355 = vpack.c.b16 %v352, %v351
      %v356 = vpack.c.b16 %v354, %v353
      %vm359 = vcmask 261120
      %v361 = vsel %vm359, %v335, 0
      %363 = vmatprep.subr.bf16.mxu0 0
      %364 = vmatpush1.bf16.msra.mxu0 %v355
      %365 = vmatprep.subr.bf16.mxu0 0
      %366 = vmatpush1.bf16.msra.mxu0 %v356
      %367 = vmatprep.subr.bf16.mxu0 0
      %368 = vmatpush1.bf16.msra.mxu0 0
      %369 = vmatprep.subr.bf16.mxu0 0
      %370 = vmatpush1.bf16.msra.mxu0 0
      %371 = vmatprep.subr.bf16.mxu0 0
      %372 = vmatpush1.bf16.msra.mxu0 0
      %373 = vmatprep.subr.bf16.mxu0 0
      %374 = vmatpush1.bf16.msra.mxu0 0
      %375 = vmatprep.subr.bf16.mxu0 0
      %376 = vmatpush1.bf16.msra.mxu0 0
      %377 = vmatprep.subr.bf16.mxu0 0
      %378 = vmatpush1.bf16.msra.mxu0 0
      %379 = vmatprep.subr.bf16.mxu0 0
      %380 = vmatpush1.bf16.msra.mxu0 0
      %381 = vmatprep.subr.bf16.mxu0 0
      %382 = vmatpush1.bf16.msra.mxu0 0
      %383 = vmatprep.subr.bf16.mxu0 0
      %384 = vmatpush1.bf16.msra.mxu0 0
      %385 = vmatprep.subr.bf16.mxu0 0
      %386 = vmatpush1.bf16.msra.mxu0 0
      %387 = vmatprep.subr.bf16.mxu0 0
      %388 = vmatpush1.bf16.msra.mxu0 0
      %389 = vmatprep.subr.bf16.mxu0 0
      %390 = vmatpush1.bf16.msra.mxu0 0
      %391 = vmatprep.subr.bf16.mxu0 0
      %392 = vmatpush1.bf16.msra.mxu0 0
      %393 = vmatprep.subr.bf16.mxu0 0
      %394 = vmatpush1.bf16.msra.mxu0 0
      %395 = vmatprep.mubr.bf16.mxu0 0
      %396 = vmatmul.mubr.bf16.gmra.mrb[0].mxu0 %v361
      %v397 = vpop.f32.mrb[0].mxu0
      %v398 = vadd.f32 %v345, %v397
      %v399 = vpop.f32.mrb[0].mxu0
      %v400 = vpop.f32.mrb[0].mxu0
      %v401 = vadd.f32 %v345, %v400
      %v402 = vpop.f32.mrb[0].mxu0
      %403 = vdwg.mxu0
      %v404 = vmax.f32 %v398, 0.0
      %v405 = vmax.f32 %v401, 0.0
      %v406 = vpack.c.bf16 %v405, %v404
      %v407 = vld [vmem:[%s3] sm:$0xf]
      %v408 = vld [vmem:[%s3 + $0x4] sm:$0xf]
      %v409 = vld [vmem:[%s3 + $0x8] sm:$0xf]
      %v410 = vld [vmem:[%s3 + $0xc] sm:$0xf]
      %v411 = vld [vmem:[%s3 + $0x10] sm:$0xf]
      %v412 = vld [vmem:[%s3 + $0x14] sm:$0xf]
      %v413 = vld [vmem:[%s3 + $0x18] sm:$0xf]
      %v414 = vld [vmem:[%s3 + $0x1c] sm:$0xf]
      %v415 = vld [vmem:[%s3 + $0x20] sm:$0xf]
      %v416 = vld [vmem:[%s3 + $0x24] sm:$0xf]
      %v417 = vld [vmem:[%s3 + $0x28] sm:$0xf]
      %v418 = vld [vmem:[%s3 + $0x2c] sm:$0xf]
      %v419 = vld [vmem:[%s3 + $0x30] sm:$0xf]
      %v420 = vld [vmem:[%s3 + $0x34] sm:$0xf]
      %v421 = vld [vmem:[%s3 + $0x38] sm:$0xf]
      %v422 = vld [vmem:[%s3 + $0x3c] sm:$0xf]
      %v423 = vld [vmem:[%s4] sm:$0x1]
      %v425 = vlaneseq
      %v426 = vshrl.u32 %v425, 7
      %v427 = vsub.s32 0, %v426
      %v428 = vrot.slane %v423, %v427
      %v446 = vunpack.c.l.b16 %v407
      %v447 = vunpack.c.l.b16 %v408
      %v448 = vunpack.c.l.b16 %v409
      %v449 = vunpack.c.l.b16 %v410
      %v450 = vunpack.c.l.b16 %v411
      %v451 = vunpack.c.l.b16 %v412
      %v452 = vunpack.c.l.b16 %v413
      %v453 = vunpack.c.l.b16 %v414
      %v454 = vunpack.c.l.b16 %v415
      %v455 = vunpack.c.l.b16 %v416
      %v456 = vunpack.c.l.b16 %v417
      %v457 = vunpack.c.l.b16 %v418
      %v458 = vunpack.c.l.b16 %v419
      %v459 = vunpack.c.l.b16 %v420
      %v460 = vunpack.c.l.b16 %v421
      %v461 = vunpack.c.l.b16 %v422
      %v462 = vpack.c.b16 %v447, %v446
      %v463 = vpack.c.b16 %v449, %v448
      %v464 = vpack.c.b16 %v451, %v450
      %v465 = vpack.c.b16 %v453, %v452
      %v466 = vpack.c.b16 %v455, %v454
      %v467 = vpack.c.b16 %v457, %v456
      %v468 = vpack.c.b16 %v459, %v458
      %v469 = vpack.c.b16 %v461, %v460
      %478 = vmatprep.subr.bf16.mxu0 0
      %479 = vmatpush1.bf16.msra.mxu0 %v462
      %480 = vmatprep.subr.bf16.mxu0 0
      %481 = vmatpush1.bf16.msra.mxu0 %v463
      %482 = vmatprep.subr.bf16.mxu0 0
      %483 = vmatpush1.bf16.msra.mxu0 %v464
      %484 = vmatprep.subr.bf16.mxu0 0
      %485 = vmatpush1.bf16.msra.mxu0 %v465
      %486 = vmatprep.subr.bf16.mxu0 0
      %487 = vmatpush1.bf16.msra.mxu0 %v466
      %488 = vmatprep.subr.bf16.mxu0 0
      %489 = vmatpush1.bf16.msra.mxu0 %v467
      %490 = vmatprep.subr.bf16.mxu0 0
      %491 = vmatpush1.bf16.msra.mxu0 %v468
      %492 = vmatprep.subr.bf16.mxu0 0
      %493 = vmatpush1.bf16.msra.mxu0 %v469
      %494 = vmatprep.subr.bf16.mxu0 0
      %495 = vmatpush1.bf16.msra.mxu0 0
      %496 = vmatprep.subr.bf16.mxu0 0
      %497 = vmatpush1.bf16.msra.mxu0 0
      %498 = vmatprep.subr.bf16.mxu0 0
      %499 = vmatpush1.bf16.msra.mxu0 0
      %500 = vmatprep.subr.bf16.mxu0 0
      %501 = vmatpush1.bf16.msra.mxu0 0
      %502 = vmatprep.subr.bf16.mxu0 0
      %503 = vmatpush1.bf16.msra.mxu0 0
      %504 = vmatprep.subr.bf16.mxu0 0
      %505 = vmatpush1.bf16.msra.mxu0 0
      %506 = vmatprep.subr.bf16.mxu0 0
      %507 = vmatpush1.bf16.msra.mxu0 0
      %508 = vmatprep.subr.bf16.mxu0 0
      %509 = vmatpush1.bf16.msra.mxu0 0
      %510 = vmatprep.mubr.bf16.mxu0 0
      %511 = vmatmul.mubr.bf16.gmra.mrb[0].mxu0 %v406
      %v512 = vpop.f32.mrb[0].mxu0
      %v513 = vadd.f32 %v428, %v512
      %v514 = vpop.f32.mrb[0].mxu0
      %v515 = vpop.f32.mrb[0].mxu0
      %v516 = vadd.f32 %v428, %v515
      %v517 = vpop.f32.mrb[0].mxu0
      %518 = vdwg.mxu0
      %v519 = vmax.f32 %v513, 0.0
      %v520 = vmax.f32 %v516, 0.0
      %v521 = vpack.c.bf16 %v520, %v519
      %v522 = vld [vmem:[%s5] sm:$0xff]
      %v523 = vld [vmem:[%s5 + $0x8] sm:$0xff]
      %v524 = vld [vmem:[%s5 + $0x10] sm:$0xff]
      %v525 = vld [vmem:[%s5 + $0x18] sm:$0xff]
      %v526 = vld [vmem:[%s5 + $0x20] sm:$0xff]
      %v527 = vld [vmem:[%s5 + $0x28] sm:$0xff]
      %v528 = vld [vmem:[%s5 + $0x30] sm:$0xff]
      %v529 = vld [vmem:[%s5 + $0x38] sm:$0xff]
      %v530 = vld [vmem:[%s5 + $0x40] sm:$0xff]
      %v531 = vld [vmem:[%s5 + $0x48] sm:$0xff]
      %v532 = vld [vmem:[%s5 + $0x50] sm:$0xff]
      %v533 = vld [vmem:[%s5 + $0x58] sm:$0xff]
      %v534 = vld [vmem:[%s5 + $0x60] sm:$0xff]
      %v535 = vld [vmem:[%s5 + $0x68] sm:$0xff]
      %v536 = vld [vmem:[%s5 + $0x70] sm:$0xff]
      %v537 = vld [vmem:[%s5 + $0x78] sm:$0xff]
      %v554 = vunpack.c.l.b16 %v522
      %v555 = vunpack.c.h.b16 %v522
      %v556 = vunpack.c.l.b16 %v523
      %v557 = vunpack.c.h.b16 %v523
      %v558 = vunpack.c.l.b16 %v524
      %v559 = vunpack.c.h.b16 %v524
      %v560 = vunpack.c.l.b16 %v525
      %v561 = vunpack.c.h.b16 %v525
      %v562 = vunpack.c.l.b16 %v526
      %v563 = vunpack.c.h.b16 %v526
      %v564 = vunpack.c.l.b16 %v527
      %v565 = vunpack.c.h.b16 %v527
      %v566 = vunpack.c.l.b16 %v528
      %v567 = vunpack.c.h.b16 %v528
      %v568 = vunpack.c.l.b16 %v529
      %v569 = vunpack.c.h.b16 %v529
      %v570 = vunpack.c.l.b16 %v530
      %v571 = vunpack.c.h.b16 %v530
      %v572 = vunpack.c.l.b16 %v531
      %v573 = vunpack.c.h.b16 %v531
      %v574 = vunpack.c.l.b16 %v532
      %v575 = vunpack.c.h.b16 %v532
      %v576 = vunpack.c.l.b16 %v533
      %v577 = vunpack.c.h.b16 %v533
      %v578 = vunpack.c.l.b16 %v534
      %v579 = vunpack.c.h.b16 %v534
      %v580 = vunpack.c.l.b16 %v535
      %v581 = vunpack.c.h.b16 %v535
      %v582 = vunpack.c.l.b16 %v536
      %v583 = vunpack.c.h.b16 %v536
      %v584 = vunpack.c.l.b16 %v537
      %v585 = vunpack.c.h.b16 %v537
      %v586 = vpack.c.b16 %v556, %v554
      %v587 = vpack.c.b16 %v557, %v555
      %v588 = vpack.c.b16 %v560, %v558
      %v589 = vpack.c.b16 %v561, %v559
      %v590 = vpack.c.b16 %v564, %v562
      %v591 = vpack.c.b16 %v565, %v563
      %v592 = vpack.c.b16 %v568, %v566
      %v593 = vpack.c.b16 %v569, %v567
      %v594 = vpack.c.b16 %v572, %v570
      %v595 = vpack.c.b16 %v573, %v571
      %v596 = vpack.c.b16 %v576, %v574
      %v597 = vpack.c.b16 %v577, %v575
      %v598 = vpack.c.b16 %v580, %v578
      %v599 = vpack.c.b16 %v581, %v579
      %v600 = vpack.c.b16 %v584, %v582
      %v601 = vpack.c.b16 %v585, %v583
      %618 = vmatprep.subr.bf16.mxu0 %v587
      %619 = vmatpush1.bf16.msra.mxu0 %v586
      %620 = vmatprep.subr.bf16.mxu0 %v589
      %621 = vmatpush1.bf16.msra.mxu0 %v588
      %622 = vmatprep.subr.bf16.mxu0 %v591
      %623 = vmatpush1.bf16.msra.mxu0 %v590
      %624 = vmatprep.subr.bf16.mxu0 %v593
      %625 = vmatpush1.bf16.msra.mxu0 %v592
      %626 = vmatprep.subr.bf16.mxu0 %v595
      %627 = vmatpush1.bf16.msra.mxu0 %v594
      %628 = vmatprep.subr.bf16.mxu0 %v597
      %629 = vmatpush1.bf16.msra.mxu0 %v596
      %630 = vmatprep.subr.bf16.mxu0 %v599
      %631 = vmatpush1.bf16.msra.mxu0 %v598
      %632 = vmatprep.subr.bf16.mxu0 %v601
      %633 = vmatpush1.bf16.msra.mxu0 %v600
      %634 = vmatprep.subr.bf16.mxu0 0
      %635 = vmatpush1.bf16.msra.mxu0 0
      %636 = vmatprep.subr.bf16.mxu0 0
      %637 = vmatpush1.bf16.msra.mxu0 0
      %638 = vmatprep.subr.bf16.mxu0 0
      %639 = vmatpush1.bf16.msra.mxu0 0
      %640 = vmatprep.subr.bf16.mxu0 0
      %641 = vmatpush1.bf16.msra.mxu0 0
      %642 = vmatprep.subr.bf16.mxu0 0
      %643 = vmatpush1.bf16.msra.mxu0 0
      %644 = vmatprep.subr.bf16.mxu0 0
      %645 = vmatpush1.bf16.msra.mxu0 0
      %646 = vmatprep.subr.bf16.mxu0 0
      %647 = vmatpush1.bf16.msra.mxu0 0
      %648 = vmatprep.subr.bf16.mxu0 0
      %649 = vmatpush1.bf16.msra.mxu0 0
      %650 = vmatprep.mubr.bf16.mxu0 0
      %651 = vmatmul.mubr.bf16.gmra.mrb[0].mxu0 %v521
      %v652 = vpop.f32.mrb[0].mxu0
      %v653 = vadd.f32 0.0, %v652
      %v654 = vpop.f32.mrb[0].mxu0
      %v655 = vadd.f32 0.0, %v654
      %v656 = vpop.f32.mrb[0].mxu0
      %v657 = vadd.f32 0.0, %v656
      %v658 = vpop.f32.mrb[0].mxu0
      %v659 = vadd.f32 0.0, %v658
      %660 = vdwg.mxu0
      %v661 = vpack.c.bf16 %v657, %v653
      %v662 = vpack.c.bf16 %v659, %v655
      %v665 = vunpack.c.l.b16 %v661
      %v666 = vunpack.c.l.b16 %v662
      %v667 = vunpack.c.h.b16 %v661
      %v668 = vunpack.c.h.b16 %v662
      %v669 = vpack.c.b16 %v666, %v665
      %v670 = vpack.c.b16 %v668, %v667
      %673 = vst [vmem:[%s322] sm:$0xff] %v669
      %674 = vst [vmem:[%s322 + $0x8] sm:$0xff] %v670
      %s675 = smul.u32 %s20, 16
      %v676 = vlaneseq
      %v677 = vshrl.u32 %v676, 7
      %v678 = vadd.s32 %v677, 8
      %v679 = vstv %s675
      %v680 = vadd.s32 %v677, %v679
      %v681 = vadd.s32 %v678, %v679
      %vm682 = vcmp.lt.s32.totalorder %v680, 20
      %vm683 = vcmp.lt.s32.totalorder %v681, 20
      %v684 = vsel %vm682, 1, 0
      %v685 = vsel %vm683, 1, 0
      %v686 = vcvt.s32.f32 %v684
      %v687 = vcvt.s32.f32 %v685
      %vm688 = vcmask 7168
      %v689 = vsel %vm688, %v686, 0.0
      %v690 = vsel %vm688, %v687, 0.0
      %v691 = vadd.f32 %v689, %v690
      %692 = vadd.xlane.f32.xlu0 %v691
      %v693 = vpop.xlane.xlu0 %692
      %v694 = vrot.slane %v693, 4
      %v695 = vadd.f32 %v693, %v694
      %v696 = vrot.slane %v695, 2
      %v697 = vadd.f32 %v695, %v696
      %v698 = vrot.slane %v697, 1
      %v699 = vadd.f32 %v697, %v698
      %s700 = vtos %v699
      %s701 = smax.f32 %s700, 1.0
      %v702 = vmul.f32 %v653, %v686
      %v703 = vmul.f32 %v655, %v686
      %v704 = vmul.f32 %v657, %v687
      %v705 = vmul.f32 %v659, %v687
      %v706 = vadd.f32 %v702, %v704
      %v707 = vrot.slane %v706, 4
      %v708 = vadd.f32 %v706, %v707
      %v709 = vrot.slane %v708, 2
      %v710 = vadd.f32 %v708, %v709
      %v711 = vrot.slane %v710, 1
      %v712 = vadd.f32 %v710, %v711
      %v713 = vadd.f32 %v703, %v705
      %v714 = vrot.slane %v713, 4
      %v715 = vadd.f32 %v713, %v714
      %v716 = vrot.slane %v715, 2
      %v717 = vadd.f32 %v715, %v716
      %v718 = vrot.slane %v717, 1
      %v719 = vadd.f32 %v717, %v718
      %v720 = vstv %s701
      %v721 = vrcp.pop %v720
      %v722 = vmul.f32 %v712, %v721
      %v723 = vmul.f32 %v719, %v721
      %v724 = vsub.f32 %v653, %v722
      %v725 = vsub.f32 %v655, %v723
      %v726 = vsub.f32 %v657, %v722
      %v727 = vsub.f32 %v659, %v723
      %v728 = vmul.f32 %v724, %v686
      %v729 = vmul.f32 %v725, %v686
      %v730 = vmul.f32 %v726, %v687
      %v731 = vmul.f32 %v727, %v687
      %v734 = vcombine.low %v712, %v719
      %v736 = vunpack.c.l.s4 1966171168
      %v737 = vunpack.c.0.s8 %v736
      %v738 = vlaneseq
      %v739 = vshrl.u32 %v738, 7
      %v740 = vsub.s32 %v737, %v739
      %v741 = vrot.slane %v734, %v740
      %v743 = vunpack.c.l.s4 1966171168
      %v744 = vunpack.c.0.s8 %v743
      %v745 = vlaneseq
      %v746 = vshrl.u32 %v745, 7
      %v747 = vsub.s32 %v744, %v746
      %v748 = vrot.slane %v741, %v747
      %v750 = vlaneseq
      %vm751 = vcmp.ge.s32.totalorder %v750, 0
      %vm752 = vcmp.lt.s32.totalorder %v750, 256
      %vm753 = vmand %vm751, %vm752
      %754 = vst.msk [vmem:[%s327] sm:$0x3] %vm753, %v748
      %v755 = vmul.f32 %v728, %v728
      %v756 = vmul.f32 %v729, %v729
      %v757 = vmul.f32 %v730, %v730
      %v758 = vmul.f32 %v731, %v731
      %v759 = vadd.f32 %v755, %v757
      %v760 = vrot.slane %v759, 4
      %v761 = vadd.f32 %v759, %v760
      %v762 = vrot.slane %v761, 2
      %v763 = vadd.f32 %v761, %v762
      %v764 = vrot.slane %v763, 1
      %v765 = vadd.f32 %v763, %v764
      %v766 = vadd.f32 %v756, %v758
      %v767 = vrot.slane %v766, 4
      %v768 = vadd.f32 %v766, %v767
      %v769 = vrot.slane %v768, 2
      %v770 = vadd.f32 %v768, %v769
      %v771 = vrot.slane %v770, 1
      %v772 = vadd.f32 %v770, %v771
      %v775 = vcombine.low %v765, %v772
      %v777 = vunpack.c.l.s4 1966171168
      %v778 = vunpack.c.0.s8 %v777
      %v779 = vlaneseq
      %v780 = vshrl.u32 %v779, 7
      %v781 = vsub.s32 %v778, %v780
      %v782 = vrot.slane %v775, %v781
      %v784 = vunpack.c.l.s4 1966171168
      %v785 = vunpack.c.0.s8 %v784
      %v786 = vlaneseq
      %v787 = vshrl.u32 %v786, 7
      %v788 = vsub.s32 %v785, %v787
      %v789 = vrot.slane %v782, %v788
      %791 = vst.msk [vmem:[%s331] sm:$0x3] %vm753, %v789
      %s792 = smul.u32 2, %s20
      %p793 = scmp.lt.s32.totalorder %s792, 3
      %s794 = scalar_select %p793, %s792, 3
      %s795 = smul.addr %s794, 2
      %s796 = smul.addr %s795, 4
      %s797 = scalar_lea.vmem %s6, %s796
      %p798 = scmp.lt.s32.totalorder %s20, 1
      %s799 = scalar_select %p798, %s20, 1
      %s800 = smul.addr %s799, 2
      %s801 = scalar_lea.vmem %s7, %s800
      %p802 = scmp.lt.s32.totalorder %s20, 1
      %s803 = scalar_select %p802, %s20, 1
      %s804 = smul.addr %s803, 2
      %s805 = scalar_lea.vmem %s8, %s804
      // Predicated region
      $region45: #{encoder_forward.2} parent=43 // pred_check
        %p806 = pneg %p169
      $region46: #{encoder_forward.2} parent=43 // pred_check_branch
        %808 = sbr.rel (%p806) target = $region48
      $region47: #{encoder_forward.2} parent=43 // pred_region
        %s809 = smul.u32 2, %s20
      $region48: #{encoder_forward.2} parent=43 // pred_fallthru
        _
      // Predicated region
      $region49: #{encoder_forward.2} parent=43 // pred_check
        %p810 = pneg %p195
      $region50: #{encoder_forward.2} parent=43 // pred_check_branch
        %812 = sbr.rel (%p810) target = $region52
      $region51: #{encoder_forward.2} parent=43 // pred_region
        _
      $region52: #{encoder_forward.2} parent=43 // pred_fallthru
        _
      // Predicated region
      $region53: #{encoder_forward.2} parent=43 // pred_check
        %p813 = pneg %p221
      $region54: #{encoder_forward.2} parent=43 // pred_check_branch
        %815 = sbr.rel (%p813) target = $region56
      $region55: #{encoder_forward.2} parent=43 // pred_region
        _
      $region56: #{encoder_forward.2} parent=43 // pred_fallthru
        _
    $region44: #{encoder_forward.2} parent=5 // pred_fallthru
      _
    %p816 = scmp.le.s32.totalorder 2, %s15
    // Predicated region
    $region57: #{encoder_forward.2} parent=5 // pred_check
      %p817 = pneg %p816
    $region58: #{encoder_forward.2} parent=5 // pred_check_branch
      %819 = sbr.rel (%p817) target = $region60
    $region59: #{encoder_forward.2} parent=5 // pred_region
      %s820 = ssub.s32 %s15, 2
      // Predicated region
      $region61: #{encoder_forward.2} parent=59 // pred_check
        %p821 = pneg %p175
      $region62: #{encoder_forward.2} parent=59 // pred_check_branch
        %823 = sbr.rel (%p821) target = $region64
      $region63: #{encoder_forward.2} parent=59 // pred_region
        %s824 = smul.u32 2, %s21
        %p825 = scmp.lt.s32.totalorder %s824, 3
        %s826 = scalar_select %p825, %s824, 3
        %s827 = smul.addr %s826, 2
        %s828 = smul.addr %s827, 4
        %s829 = scalar_lea.vmem %s6, %s828
      $region64: #{encoder_forward.2} parent=59 // pred_fallthru
        _
      // Predicated region
      $region65: #{encoder_forward.2} parent=59 // pred_check
        %p830 = pneg %p201
      $region66: #{encoder_forward.2} parent=59 // pred_check_branch
        %832 = sbr.rel (%p830) target = $region68
      $region67: #{encoder_forward.2} parent=59 // pred_region
        %p833 = scmp.lt.s32.totalorder %s21, 1
        %s834 = scalar_select %p833, %s21, 1
        %s835 = smul.addr %s834, 2
        %s836 = scalar_lea.vmem %s7, %s835
      $region68: #{encoder_forward.2} parent=59 // pred_fallthru
        _
      // Predicated region
      $region69: #{encoder_forward.2} parent=59 // pred_check
        %p837 = pneg %p227
      $region70: #{encoder_forward.2} parent=59 // pred_check_branch
        %839 = sbr.rel (%p837) target = $region72
      $region71: #{encoder_forward.2} parent=59 // pred_region
        %p840 = scmp.lt.s32.totalorder %s21, 1
        %s841 = scalar_select %p840, %s21, 1
        %s842 = smul.addr %s841, 2
        %s843 = scalar_lea.vmem %s8, %s842
      $region72: #{encoder_forward.2} parent=59 // pred_fallthru
        _
    $region60: #{encoder_forward.2} parent=5 // pred_fallthru
      _
  $region6: #{encoder_forward.2} parent=0 // loop_footer
    %s19 = sadd.s32 1, %s15
  $region7: #{encoder_forward.2} parent=0 // loop_footer_branch
    %14 = sbr.rel target = $region3
  $region8: #{encoder_forward.2} parent=0 // loop_exit
    _

// kernel: encoder_forward.3
$region0: #{encoder_forward.3}
  #allocation0 [shape = 'u32[]', space=smem, size = 0x4, offset = 0x4, fixed_abs, tag = 'smem constant byte address 0x4 - core index']
  #allocation1 [shape = 'u32[144,128]{1,0:T(1,128)}', space=vmem, size = 0x12000, scoped, tag = 'internal scratch']
  %s0 = inlined_call_operand.vmem [shape: bf16[32,256], index: 0, kind: input, shape index: {}, may-alias: {0,3}]
  %s1 = inlined_call_operand.vmem [shape: f32[1,256], index: 1, kind: input, shape index: {}]
  %s2 = inlined_call_operand.vmem [shape: f32[1,256], index: 2, kind: input, shape index: {}]
  %s3 = inlined_call_operand.vmem [shape: bf16[32,256], index: 3, kind: output, shape index: {}, may-alias: {0,3}]
  %s4 = sld [smem:[#allocation0]]
  $region45: #{encoder_forward.3} parent=0
    _
  %s6 = ssub.s32 1, %s4
  %s7 = scalar_select 0, %s6, %s4
  loop: start=0, step=1, limit=4
  $region2: #{encoder_forward.3} parent=0 // loop_pre_header
    _
  $region3: #{encoder_forward.3} parent=0 // loop_header
    %s9 = sphi 0, %s13
    %p10 = scmp.ge.s32.totalorder %s9, 4
    %s19 = sphi 0, %s21
    %s22 = sphi 0, %s19
    %s23 = sphi 0, %s22
    %s39 = sphi 0, %s23
    %s43 = sphi 0, %s43
    %s45 = sphi 0, %s43
    %s46 = sphi 0, %s45
    %s60 = sphi 0, %s46
    %s64 = sphi 0, %s64
    %s66 = sphi 0, %s64
    %s67 = sphi 0, %s66
    %s81 = sphi 0, %s67
    %s87 = sphi 0, %s89
    %s90 = sphi 0, %s87
    %s91 = sphi 0, %s90
    %s107 = sphi 0, %s91
  $region4: #{encoder_forward.3} parent=0 // loop_header_branch
    %12 = sbr.rel (%p10) target = $region8
  $region5: #{encoder_forward.3} parent=0 // loop_body
    %s14 = ssub.s32 %s9, 1
    %s15 = ssub.s32 %s9, 2
    %s16 = sadd.s32 %s9, 1
    %s17 = ssub.s32 %s9, %s16
    %p18 = scmp.eq.s32.totalorder %s17, 0
    %s20 = sadd.s32 %s19, 1
    %s21 = scalar_select %p18, %s19, %s20
    %p24 = pneg %p18
    %p25 = scmp.eq.s32.totalorder %s9, 1
    %p26 = por %p24, %p25
    %p27 = scmp.ne.s32.totalorder %s19, %s22
    %p28 = scmp.eq.s32.totalorder %s9, 0
    %p29 = por %p27, %p28
    %p30 = scmp.ne.s32.totalorder %s19, %s22
    %p31 = scmp.eq.s32.totalorder %s14, 1
    %p32 = por %p30, %p31
    %p33 = scmp.ne.s32.totalorder %s22, %s23
    %p34 = scmp.eq.s32.totalorder %s14, 0
    %p35 = por %p33, %p34
    %p36 = scmp.ne.s32.totalorder %s22, %s23
    %p37 = scmp.eq.s32.totalorder %s15, 1
    %p38 = por %p36, %p37
    %p40 = scmp.ne.s32.totalorder %s23, %s39
    %p41 = scmp.eq.s32.totalorder %s15, 0
    %p42 = por %p40, %p41
    %s44 = sadd.s32 %s43, 1
    %p47 = scmp.eq.s32.totalorder %s9, 1
    %p48 = scmp.ne.s32.totalorder %s43, %s45
    %p49 = scmp.eq.s32.totalorder %s9, 0
    %p50 = por %p48, %p49
    %p51 = scmp.ne.s32.totalorder %s43, %s45
    %p52 = scmp.eq.s32.totalorder %s14, 1
    %p53 = por %p51, %p52
    %p54 = scmp.ne.s32.totalorder %s45, %s46
    %p55 = scmp.eq.s32.totalorder %s14, 0
    %p56 = por %p54, %p55
    %p57 = scmp.ne.s32.totalorder %s45, %s46
    %p58 = scmp.eq.s32.totalorder %s15, 1
    %p59 = por %p57, %p58
    %p61 = scmp.ne.s32.totalorder %s46, %s60
    %p62 = scmp.eq.s32.totalorder %s15, 0
    %p63 = por %p61, %p62
    %s65 = sadd.s32 %s64, 1
    %p68 = scmp.eq.s32.totalorder %s9, 1
    %p69 = scmp.ne.s32.totalorder %s64, %s66
    %p70 = scmp.eq.s32.totalorder %s9, 0
    %p71 = por %p69, %p70
    %p72 = scmp.ne.s32.totalorder %s64, %s66
    %p73 = scmp.eq.s32.totalorder %s14, 1
    %p74 = por %p72, %p73
    %p75 = scmp.ne.s32.totalorder %s66, %s67
    %p76 = scmp.eq.s32.totalorder %s14, 0
    %p77 = por %p75, %p76
    %p78 = scmp.ne.s32.totalorder %s66, %s67
    %p79 = scmp.eq.s32.totalorder %s15, 1
    %p80 = por %p78, %p79
    %p82 = scmp.ne.s32.totalorder %s67, %s81
    %p83 = scmp.eq.s32.totalorder %s15, 0
    %p84 = por %p82, %p83
    %s85 = ssub.s32 %s9, %s16
    %p86 = scmp.eq.s32.totalorder %s85, 0
    %s88 = sadd.s32 %s87, 1
    %s89 = scalar_select %p86, %s87, %s88
    %p92 = pneg %p86
    %p93 = scmp.eq.s32.totalorder %s9, 1
    %p94 = por %p92, %p93
    %p95 = scmp.ne.s32.totalorder %s87, %s90
    %p96 = scmp.eq.s32.totalorder %s9, 0
    %p97 = por %p95, %p96
    %p98 = scmp.ne.s32.totalorder %s87, %s90
    %p99 = scmp.eq.s32.totalorder %s14, 1
    %p100 = por %p98, %p99
    %p101 = scmp.ne.s32.totalorder %s90, %s91
    %p102 = scmp.eq.s32.totalorder %s14, 0
    %p103 = por %p101, %p102
    %p104 = scmp.ne.s32.totalorder %s90, %s91
    %p105 = scmp.eq.s32.totalorder %s15, 1
    %p106 = por %p104, %p105
    %p108 = scmp.ne.s32.totalorder %s91, %s107
    %p109 = scmp.eq.s32.totalorder %s15, 0
    %p110 = por %p108, %p109
    %p111 = scmp.le.s32.totalorder 1, %s9
    %p112 = scmp.lt.s32.totalorder %s9, 3
    %p113 = pnand %p111, %p112
    %p114 = pneg %p113
    // Predicated region
    $region9: #{encoder_forward.3} parent=5 // pred_check
      _
    $region10: #{encoder_forward.3} parent=5 // pred_check_branch
      %116 = sbr.rel (%p113) target = $region12
    $region11: #{encoder_forward.3} parent=5 // pred_region
      %s117 = ssub.s32 %s9, 1
      // Predicated region
      $region13: #{encoder_forward.3} parent=11 // pred_check
        %p118 = pneg %p56
      $region14: #{encoder_forward.3} parent=11 // pred_check_branch
        %120 = sbr.rel (%p118) target = $region16
      $region15: #{encoder_forward.3} parent=11 // pred_region
        _
      $region16: #{encoder_forward.3} parent=11 // pred_fallthru
        _
      // Predicated region
      $region17: #{encoder_forward.3} parent=11 // pred_check
        %p121 = pneg %p77
      $region18: #{encoder_forward.3} parent=11 // pred_check_branch
        %123 = sbr.rel (%p121) target = $region20
      $region19: #{encoder_forward.3} parent=11 // pred_region
        _
      $region20: #{encoder_forward.3} parent=11 // pred_fallthru
        _
    $region12: #{encoder_forward.3} parent=5 // pred_fallthru
      _
    %p124 = scmp.lt.s32.totalorder %s9, 2
    // Predicated region
    $region21: #{encoder_forward.3} parent=5 // pred_check
      %p125 = pneg %p124
    $region22: #{encoder_forward.3} parent=5 // pred_check_branch
      %127 = sbr.rel (%p125) target = $region24
    $region23: #{encoder_forward.3} parent=5 // pred_region
      // Predicated region
      $region25: #{encoder_forward.3} parent=23 // pred_check
        %p128 = pneg %p29
      $region26: #{encoder_forward.3} parent=23 // pred_check_branch
        %130 = sbr.rel (%p128) target = $region28
      $region27: #{encoder_forward.3} parent=23 // pred_region
        %s131 = smul.u32 2, %s9
        %p132 = scmp.lt.s32.totalorder %s131, 3
        %s133 = scalar_select %p132, %s131, 3
        %s134 = smul.addr %s133, 2
        %s135 = smul.addr %s134, 4
        %s136 = scalar_lea.vmem %s0, %s135
        %s137 = smul.u32 2, %s9
      $region28: #{encoder_forward.3} parent=23 // pred_fallthru
        _
    $region24: #{encoder_forward.3} parent=5 // pred_fallthru
      _
    %p138 = scmp.le.s32.totalorder 1, %s9
    %p139 = scmp.lt.s32.totalorder %s9, 3
    %p140 = pnand %p138, %p139
    %p141 = pneg %p140
    // Predicated region
    $region29: #{encoder_forward.3} parent=5 // pred_check
      _
    $region30: #{encoder_forward.3} parent=5 // pred_check_branch
      %143 = sbr.rel (%p140) target = $region32
    $region31: #{encoder_forward.3} parent=5 // pred_region
      %s144 = ssub.s32 %s9, 1
      %s145 = smul.u32 2, %s14
      %p146 = scmp.lt.s32.totalorder %s145, 3
      %s147 = scalar_select %p146, %s145, 3
      %s148 = smul.addr %s147, 2
      %s149 = smul.addr %s148, 4
      %s150 = scalar_lea.vmem %s0, %s149
      %p151 = pneg %p35
      %p152 = pneg %p32
      %p153 = pneg %p56
      %p154 = pneg %p53
      %p155 = pneg %p77
      %p156 = pneg %p74
      %p157 = pneg %p103
      %p158 = pneg %p100
      %s159 = smul.u32 2, %s14
      %p160 = scmp.lt.s32.totalorder %s159, 3
      %s161 = scalar_select %p160, %s159, 3
      %s162 = smul.addr %s161, 2
      %s163 = smul.addr %s162, 4
      %s164 = scalar_lea.vmem %s3, %s163
      %s165 = smul.u32 2, %s14
      %p166 = scmp.lt.s32.totalorder %s165, 3
      %s167 = scalar_select %p166, %s165, 3
      %s168 = smul.addr %s167, 2
      %s169 = smul.addr %s168, 4
      %s170 = scalar_lea.vmem %s0, %s169
      %s171 = smul.u32 2, %s14
      %s172 = smul.u32 2, %s14
      %p173 = scmp.lt.s32.totalorder %s172, 3
      %s174 = scalar_select %p173, %s172, 3
      %s175 = smul.addr %s174, 2
      %s176 = smul.addr %s175, 4
      %s177 = scalar_lea.vmem %s3, %s176
      %s178 = smul.u32 2, %s14
      %v179 = vld [vmem:[%s170] sm:$0xff]
      %v180 = vld [vmem:[%s170 + $0x8] sm:$0xff]
      %v181 = vunpack.c.l.bf16 %v179
      %v182 = vunpack.c.h.bf16 %v179
      %v183 = vunpack.c.l.bf16 %v180
      %v184 = vunpack.c.h.bf16 %v180
      %v185 = vld [vmem:[%s1] sm:$0x3]
      %v187 = vlaneseq
      %v188 = vshrl.u32 %v187, 7
      %v189 = vsub.s32 0, %v188
      %v190 = vrot.slane %v185, %v189
      %v191 = vlaneseq
      %v192 = vshrl.u32 %v191, 7
      %v193 = vsub.s32 1, %v192
      %v194 = vrot.slane %v185, %v193
      %v197 = vmul.f32 %v181, %v190
      %v198 = vmul.f32 %v182, %v194
      %v199 = vmul.f32 %v183, %v190
      %v200 = vmul.f32 %v184, %v194
      %v201 = vld [vmem:[%s2] sm:$0x3]
      %v203 = vlaneseq
      %v204 = vshrl.u32 %v203, 7
      %v205 = vsub.s32 0, %v204
      %v206 = vrot.slane %v201, %v205
      %v207 = vlaneseq
      %v208 = vshrl.u32 %v207, 7
      %v209 = vsub.s32 1, %v208
      %v210 = vrot.slane %v201, %v209
      %v213 = vadd.f32 %v197, %v206
      %v214 = vadd.f32 %v198, %v210
      %v215 = vadd.f32 %v199, %v206
      %v216 = vadd.f32 %v200, %v210
      %v217 = vmax.f32 %v214, 0.0
      %v218 = vmax.f32 %v216, 0.0
      %v219 = vand.u32 2147483647, %v214
      %v220 = vand.u32 2147483647, %v216
      %v221 = vsub.f32 0.0, %v219
      %v222 = vsub.f32 0.0, %v220
      %v223 = vmul.f32 %v221, 1.442695
      %v224 = vpow.pop %v223
      %v225 = vmul.f32 %v222, 1.442695
      %v226 = vpow.pop %v225
      %v227 = vadd.f32 %v224, 1.0
      %v228 = vlog2.pop %v227
      %v229 = vmul.f32 %v228, 0.6931472
      %v230 = vmul.f32 -0.5, %v224
      %v231 = vadd.f32 %v230, 1.0
      %v232 = vmul.f32 %v231, %v224
      %v233 = vand.u32 2147483647, %v224
      %vm234 = vcmp.lt.f32.partialorder %v233, 0.0004427343
      %v235 = vsel %vm234, %v232, %v229
      %v236 = vadd.f32 %v226, 1.0
      %v237 = vlog2.pop %v236
      %v238 = vmul.f32 %v237, 0.6931472
      %v239 = vmul.f32 -0.5, %v226
      %v240 = vadd.f32 %v239, 1.0
      %v241 = vmul.f32 %v240, %v226
      %v242 = vand.u32 2147483647, %v226
      %vm243 = vcmp.lt.f32.partialorder %v242, 0.0004427343
      %v244 = vsel %vm243, %v241, %v238
      %v245 = vadd.f32 %v217, %v235
      %v246 = vadd.f32 %v218, %v244
      %v247 = vpack.c.bf16 %v215, %v213
      %v248 = vpack.c.bf16 %v246, %v245
      %v251 = vunpack.c.l.b16 %v247
      %v252 = vunpack.c.l.b16 %v248
      %v253 = vunpack.c.h.b16 %v247
      %v254 = vunpack.c.h.b16 %v248
      %v255 = vpack.c.b16 %v252, %v251
      %v256 = vpack.c.b16 %v254, %v253
      %259 = vst [vmem:[%s177] sm:$0xff] %v255
      %260 = vst [vmem:[%s177 + $0x8] sm:$0xff] %v256
      %s261 = smul.u32 2, %s14
      %p262 = scmp.lt.s32.totalorder %s261, 3
      %s263 = scalar_select %p262, %s261, 3
      %s264 = smul.addr %s263, 2
      %s265 = smul.addr %s264, 4
      %s266 = scalar_lea.vmem %s3, %s265
      // Predicated region
      $region33: #{encoder_forward.3} parent=31 // pred_check
        %p267 = pneg %p100
      $region34: #{encoder_forward.3} parent=31 // pred_check_branch
        %269 = sbr.rel (%p267) target = $region36
      $region35: #{encoder_forward.3} parent=31 // pred_region
        %s270 = smul.u32 2, %s14
      $region36: #{encoder_forward.3} parent=31 // pred_fallthru
        _
    $region32: #{encoder_forward.3} parent=5 // pred_fallthru
      _
    %p271 = scmp.le.s32.totalorder 2, %s9
    // Predicated region
    $region37: #{encoder_forward.3} parent=5 // pred_check
      %p272 = pneg %p271
    $region38: #{encoder_forward.3} parent=5 // pred_check_branch
      %274 = sbr.rel (%p272) target = $region40
    $region39: #{encoder_forward.3} parent=5 // pred_region
      %s275 = ssub.s32 %s9, 2
      // Predicated region
      $region41: #{encoder_forward.3} parent=39 // pred_check
        %p276 = pneg %p106
      $region42: #{encoder_forward.3} parent=39 // pred_check_branch
        %278 = sbr.rel (%p276) target = $region44
      $region43: #{encoder_forward.3} parent=39 // pred_region
        %s279 = smul.u32 2, %s15
        %p280 = scmp.lt.s32.totalorder %s279, 3
        %s281 = scalar_select %p280, %s279, 3
        %s282 = smul.addr %s281, 2
        %s283 = smul.addr %s282, 4
        %s284 = scalar_lea.vmem %s3, %s283
      $region44: #{encoder_forward.3} parent=39 // pred_fallthru
        _
    $region40: #{encoder_forward.3} parent=5 // pred_fallthru
      _
  $region6: #{encoder_forward.3} parent=0 // loop_footer
    %s13 = sadd.s32 1, %s9
  $region7: #{encoder_forward.3} parent=0 // loop_footer_branch
    %8 = sbr.rel target = $region3
  $region8: #{encoder_forward.3} parent=0 // loop_exit
    _

</llo_original>
